<compile_context>
chip_gen: v7x
topology: tpu7x:2x2x1
jax: 0.10.0
libtpu: 0.0.40
codegen_flags: <defaults>
</compile_context>

<pallas_src>
import functools
import math

import numpy as np
import jax
import jax.numpy as jnp
from jax import lax
from jax.experimental import pallas as pl
from jax.experimental.pallas import tpu as pltpu


# ------------------------------ helpers ------------------------------------ #

def _pick_tile(dim, target):
    """Largest divisor of `dim` that is <= target (power-of-two descent)."""
    if dim <= target:
        return dim
    t = target
    while dim % t:
        t //= 2
    return t


def _pick_head_group(num_heads, head_dim, target_lanes=256, max_group=4):
    """Heads packed per QKV-projection grid step: fill >= 256 output lanes
    (v6e/v7x MXU width) without blowing VMEM (cap 4; must divide num_heads)."""
    g = max(1, min(max_group, max(1, target_lanes // head_dim), num_heads))
    while num_heads % g:
        g -= 1
    return g


def _group_heads_weight(w, num_groups):
    """PyTorch Linear weight (out, in) -> (num_groups, in, out/num_groups)
    such that x @ result[g] == (x @ w.T)[:, g*gd:(g+1)*gd]."""
    out_dim, in_dim = w.shape
    gd = out_dim // num_groups
    return jnp.transpose(w.T.reshape(in_dim, num_groups, gd), (1, 0, 2))


def rope_cos_sin_half(position_ids, head_dim, base, dtype=jnp.float32):
    """Half-width RoPE tables (B, S, hd/2).  HF builds emb = concat([f, f]),
    so cos/sin top and bottom halves are identical -> only pass the half."""
    inv_freq = 1.0 / (base ** (jnp.arange(0, head_dim, 2, dtype=jnp.float32)
                               / head_dim))                      # (hd/2,)
    freqs = position_ids.astype(jnp.float32)[:, :, None] * inv_freq[None, None, :]
    return jnp.cos(freqs).astype(dtype), jnp.sin(freqs).astype(dtype)


# ----------------------------- Pallas kernels ------------------------------ #

def qkv_rope_proj_kernel(x_ref, cos_ref, sin_ref, wq_ref, wk_ref, wv_ref,
                         q_ref, k_ref, v_ref, *, head_dim, scale):
    # Blocks:
    #   x_ref            (1, ts, H)
    #   cos_ref, sin_ref (1, ts, hd/2)     RoPE tables at these positions
    #   w*_ref           (1, H, G*hd)      packed weights for G heads
    #   q/k/v out        (1, G, ts, hd)    heads-major (B, NH, S, hd) arrays
    # Q/K are written already rotated; the 1/sqrt(hd) scale is folded into Q.
    G = q_ref.shape[1]
    hd = head_dim
    half = hd // 2

    x = x_ref[0]                                               # (ts, H)
    q = jnp.dot(x, wq_ref[0], preferred_element_type=jnp.float32)  # (ts, G*hd)
    k = jnp.dot(x, wk_ref[0], preferred_element_type=jnp.float32)
    v = jnp.dot(x, wv_ref[0], preferred_element_type=jnp.float32)
    c = cos_ref[0].astype(jnp.float32)                         # (ts, half)
    s = sin_ref[0].astype(jnp.float32)

    for g in range(G):
        lo, mid, hi = g * hd, g * hd + half, (g + 1) * hd
        q1, q2 = q[:, lo:mid], q[:, mid:hi]
        k1, k2 = k[:, lo:mid], k[:, mid:hi]
        # rotate_half: [q1, q2]*cos + [-q2, q1]*sin with cos/sin halves equal.
        q_ref[0, g] = (jnp.concatenate([q1 * c - q2 * s, q2 * c + q1 * s],
                                       axis=-1) * scale).astype(q_ref.dtype)
        k_ref[0, g] = jnp.concatenate([k1 * c - k2 * s, k2 * c + k1 * s],
                                      axis=-1).astype(k_ref.dtype)
        v_ref[0, g] = v[:, lo:hi].astype(v_ref.dtype)


def matmul_kernel(x_ref, w_ref, o_ref, acc_ref):
    # Canonical tiled matmul with f32 accumulator; k axis is "arbitrary".
    @pl.when(pl.program_id(2) == 0)
    def _():
        acc_ref[...] = jnp.zeros_like(acc_ref)

    acc_ref[...] += jnp.dot(x_ref[...], w_ref[...],
                            preferred_element_type=jnp.float32)

    @pl.when(pl.program_id(2) == pl.num_programs(2) - 1)
    def _():
        o_ref[...] = acc_ref[...].astype(o_ref.dtype)


def flash_attention_kernel(q_ref, k_ref, v_ref, o_ref, m_ref, l_ref, acc_ref,
                           *, causal):
    # Blocks (Q/K already rotated, Q already scaled by 1/sqrt(hd)):
    #   q_ref          (1, NH, tq,  hd)
    #   k_ref, v_ref   (1, NH, tkv, hd)
    #   o_ref          (1, tq,  NH*hd)   lane-dense output block
    # Scratch (persists across the kv grid axis):
    #   m_ref, l_ref   (NH, tq, 1) f32 running max / sum
    #   acc_ref        (NH, tq, hd) f32 output accumulator
    NH, tq, hd = q_ref.shape[1], q_ref.shape[2], q_ref.shape[3]
    tkv = k_ref.shape[2]
    qi = pl.program_id(1)
    ki = pl.program_id(2)

    @pl.when(ki == 0)
    def _init():
        m_ref[...] = jnp.full(m_ref.shape, -jnp.inf, dtype=m_ref.dtype)
        l_ref[...] = jnp.zeros_like(l_ref)
        acc_ref[...] = jnp.zeros_like(acc_ref)

    def _make_step(apply_mask):
        def body():
            # Scores for all heads at once: (NH, tq, tkv), f32 MXU accumulation.
            s = jnp.einsum("hqd,hkd->hqk", q_ref[0], k_ref[0],
                           preferred_element_type=jnp.float32)
            if apply_mask:
                rows = qi * tq + lax.broadcasted_iota(jnp.int32, (tq, tkv), 0)
                cols = ki * tkv + lax.broadcasted_iota(jnp.int32, (tq, tkv), 1)
                s = jnp.where((cols <= rows)[None, :, :], s, -1e9)  # s stays f32
            m_prev = m_ref[...]
            m_new = jnp.maximum(m_prev, jnp.max(s, axis=-1, keepdims=True))
            alpha = jnp.exp(m_prev - m_new)
            p = jnp.exp(s - m_new)
            l_ref[...] = alpha * l_ref[...] + jnp.sum(p, axis=-1, keepdims=True)
            acc_ref[...] = alpha * acc_ref[...] + jnp.einsum(
                "hqk,hkd->hqd", p.astype(v_ref.dtype), v_ref[0],
                preferred_element_type=jnp.float32)
            m_ref[...] = m_new
            # attention_dropout == 0.0 -> no-op.
        return body

    if causal:
        # Fully-visible blocks: unmasked path.  Diagonal-straddling block:
        # masked path.  Fully-masked blocks: skipped entirely (and their K/V
        # DMAs are elided by the clamped index_map in the wrapper).
        fully_visible = (ki + 1) * tkv - 1 <= qi * tq
        straddles = jnp.logical_and(ki * tkv <= qi * tq + (tq - 1),
                                    jnp.logical_not(fully_visible))
        pl.when(fully_visible)(_make_step(False))
        pl.when(straddles)(_make_step(True))
    else:
        _make_step(False)()

    @pl.when(ki == pl.num_programs(2) - 1)
    def _finalize():
        l = l_ref[...]
        inv_l = pl.reciprocal(l, approx=True)      # EUP slot, off the VALU
        inv_l = inv_l * (2.0 - l * inv_l)          # one Newton step -> ~f32
        for h in range(NH):                        # per-head, lane-dense store
            o_ref[0, :, h * hd:(h + 1) * hd] = (
                acc_ref[h] * inv_l[h]).astype(o_ref.dtype)


# ------------------------------ Wrappers ----------------------------------- #

def _pallas_qkv_rope_proj(x, cos_h, sin_h, wq_g, wk_g, wv_g, head_dim, *,
                          seq_tile, scale):
    B, S, H = x.shape
    NG, _, ghd = wq_g.shape
    G = ghd // head_dim
    NH = NG * G
    half = head_dim // 2
    kern = functools.partial(qkv_rope_proj_kernel, head_dim=head_dim,
                             scale=scale)
    x_spec = pl.BlockSpec((1, seq_tile, H), lambda hg, b, si: (b, si, 0))
    cs_spec = pl.BlockSpec((1, seq_tile, half), lambda hg, b, si: (b, si, 0))
    w_spec = pl.BlockSpec((1, H, ghd), lambda hg, b, si: (hg, 0, 0))
    out_spec = pl.BlockSpec((1, G, seq_tile, head_dim),
                            lambda hg, b, si: (b, hg, si, 0))
    out_sds = jax.ShapeDtypeStruct((B, NH, S, head_dim), x.dtype)
    return pl.pallas_call(
        kern,
        out_shape=(out_sds, out_sds, out_sds),
        grid=(NG, B, S // seq_tile),     # head-group outermost -> weights resident
        in_specs=[x_spec, cs_spec, cs_spec, w_spec, w_spec, w_spec],
        out_specs=(out_spec, out_spec, out_spec),
        compiler_params=pltpu.CompilerParams(
            dimension_semantics=("parallel", "parallel", "parallel"),
            vmem_limit_bytes=48 * 1024 * 1024),
    )(x, cos_h, sin_h, wq_g, wk_g, wv_g)


def _pallas_flash_attention(q, k, v, *, causal, tq, tkv):
    B, NH, S, hd = q.shape
    H = NH * hd
    kern = functools.partial(flash_attention_kernel, causal=causal)
    q_spec = pl.BlockSpec((1, NH, tq, hd), lambda b, qi, ki: (b, 0, qi, 0))

    if causal:
        def kv_index(b, qi, ki):
            # Clamp fully-masked kv blocks to the last block actually needed:
            # the block index repeats, so Pallas elides the K/V DMA; compute
            # for those steps is skipped inside the kernel.
            last_needed = (qi * tq + (tq - 1)) // tkv
            return (b, 0, jnp.minimum(ki, last_needed), 0)
    else:
        def kv_index(b, qi, ki):
            return (b, 0, ki, 0)

    kv_spec = pl.BlockSpec((1, NH, tkv, hd), kv_index)
    o_spec = pl.BlockSpec((1, tq, H), lambda b, qi, ki: (b, qi, 0))
    return pl.pallas_call(
        kern,
        out_shape=jax.ShapeDtypeStruct((B, S, H), q.dtype),
        grid=(B, S // tq, S // tkv),
        in_specs=[q_spec, kv_spec, kv_spec],
        out_specs=o_spec,
        scratch_shapes=[
            pltpu.VMEM((NH, tq, 1), jnp.float32),    # running max m
            pltpu.VMEM((NH, tq, 1), jnp.float32),    # running sum l
            pltpu.VMEM((NH, tq, hd), jnp.float32),   # output accumulator
        ],
        compiler_params=pltpu.CompilerParams(
            dimension_semantics=("parallel", "parallel", "arbitrary"),
            vmem_limit_bytes=48 * 1024 * 1024),
    )(q, k, v)


def _pallas_matmul(x2d, w):
    M, K = x2d.shape
    _, N = w.shape
    tm = _pick_tile(M, 512)
    tn = _pick_tile(N, 512)
    tk = _pick_tile(K, 512)
    return pl.pallas_call(
        matmul_kernel,
        out_shape=jax.ShapeDtypeStruct((M, N), x2d.dtype),
        grid=(M // tm, N // tn, K // tk),
        in_specs=[pl.BlockSpec((tm, tk), lambda i, j, k: (i, k)),
                  pl.BlockSpec((tk, tn), lambda i, j, k: (k, j))],
        out_specs=pl.BlockSpec((tm, tn), lambda i, j, k: (i, j)),
        scratch_shapes=[pltpu.VMEM((tm, tn), jnp.float32)],
        compiler_params=pltpu.CompilerParams(
            dimension_semantics=("parallel", "parallel", "arbitrary"),
            vmem_limit_bytes=48 * 1024 * 1024),
    )(x2d, w)


def llama_attention_forward(hidden_states, position_ids, params, num_heads,
                            rope_theta, *, causal=True):
    """hidden_states: (B, S, H).  Standard causal masking is generated inside
    the attention kernel (no materialized mask)."""
    # TODO(synk): arbitrary user-supplied additive attention_mask tensors are
    # not supported; only the standard causal mask (or no mask) is implemented.
    B, S, H = hidden_states.shape
    hd = H // num_heads
    scale = 1.0 / math.sqrt(hd)
    seq_tile = _pick_tile(S, 128)       # q / projection tile
    kv_tile = _pick_tile(S, 256)        # 256-wide score matmul on v6e/v7x MXU

    # Linear weights stored PyTorch-style (out, in); packed per head-group.
    G = _pick_head_group(num_heads, hd)
    num_groups = num_heads // G
    wq_g = _group_heads_weight(params["wq"], num_groups)   # (NG, H, G*hd)
    wk_g = _group_heads_weight(params["wk"], num_groups)
    wv_g = _group_heads_weight(params["wv"], num_groups)
    wo_t = params["wo"].T                                   # (H, H)

    cos_h, sin_h = rope_cos_sin_half(position_ids, hd, rope_theta, jnp.float32)

    # Fused QKV projection + RoPE (+ 1/sqrt(hd) folded into Q).
    q, k, v = _pallas_qkv_rope_proj(hidden_states, cos_h, sin_h, wq_g, wk_g,
                                    wv_g, hd, seq_tile=seq_tile, scale=scale)

    attn = _pallas_flash_attention(q, k, v, causal=causal,
                                   tq=seq_tile, tkv=kv_tile)   # (B, S, H)

    out2d = _pallas_matmul(attn.reshape(B * S, H), wo_t)
    return out2d.reshape(B, S, H)


# ------------------------- Pure-JAX reference ------------------------------ #

def _reference(hidden_states, position_ids, attention_mask, params,
               num_heads, rope_theta):
    B, S, H = hidden_states.shape
    hd = H // num_heads
    q = (hidden_states @ params["wq"].T).reshape(B, S, num_heads, hd).transpose(0, 2, 1, 3)
    k = (hidden_states @ params["wk"].T).reshape(B, S, num_heads, hd).transpose(0, 2, 1, 3)
    v = (hidden_states @ params["wv"].T).reshape(B, S, num_heads, hd).transpose(0, 2, 1, 3)

    inv_freq = 1.0 / (rope_theta ** (jnp.arange(0, hd, 2, dtype=jnp.float32) / hd))
    freqs = position_ids.astype(jnp.float32)[:, :, None] * inv_freq[None, None, :]
    emb = jnp.concatenate([freqs, freqs], axis=-1)
    cos = jnp.cos(emb).astype(hidden_states.dtype)[:, None]
    sin = jnp.sin(emb).astype(hidden_states.dtype)[:, None]

    def rot_half(x):
        x1, x2 = x[..., :hd // 2], x[..., hd // 2:]
        return jnp.concatenate([-x2, x1], axis=-1)

    q = q * cos + rot_half(q) * sin
    k = k * cos + rot_half(k) * sin
    scores = jnp.einsum("bhqd,bhkd->bhqk", q, k) / math.sqrt(hd)
    if attention_mask is not None:
        scores = scores + attention_mask[:, :, :S, :S]
    attn = jax.nn.softmax(scores.astype(jnp.float32), axis=-1).astype(q.dtype)
    out = jnp.einsum("bhqk,bhkd->bhqd", attn, v)
    out = out.transpose(0, 2, 1, 3).reshape(B, S, H)
    return out @ params["wo"].T


# --------------------------------- Main ------------------------------------ #

if __name__ == "__main__":
    # Small config consistent with the module: hidden=64, heads=4 -> head_dim=16.
    B, S, H, NH = 2, 8, 64, 4
    ROPE_THETA = 10000.0
    INIT_RANGE = 0.02

    key = jax.random.PRNGKey(0)
    kx, kq, kk, kv, ko = jax.random.split(key, 5)

    hidden_states = jax.random.normal(kx, (B, S, H), dtype=jnp.float32)
    position_ids = jnp.broadcast_to(jnp.arange(S, dtype=jnp.int32)[None, :], (B, S))

    params = {
        "wq": INIT_RANGE * jax.random.normal(kq, (H, H), dtype=jnp.float32),
        "wk": INIT_RANGE * jax.random.normal(kk, (H, H), dtype=jnp.float32),
        "wv": INIT_RANGE * jax.random.normal(kv, (H, H), dtype=jnp.float32),
        "wo": INIT_RANGE * jax.random.normal(ko, (H, H), dtype=jnp.float32),
    }

    out = llama_attention_forward(hidden_states, position_ids, params, NH,
                                  ROPE_THETA, causal=True)
    out = jax.block_until_ready(out)

    # Reference uses the HF-style additive causal mask (equivalent semantics).
    causal_mask = jnp.where(
        jnp.tril(jnp.ones((S, S), dtype=bool)), 0.0, -1e9
    ).astype(jnp.float32)[None, None]
    attention_mask = jnp.broadcast_to(causal_mask, (B, 1, S, S))
    ref = _reference(hidden_states, position_ids, attention_mask, params,
                     NH, ROPE_THETA)
    np.testing.assert_allclose(np.asarray(out), np.asarray(ref),
                               rtol=1e-4, atol=1e-4)

    print("KERNEL_OK")
</pallas_src>

<mosaic_0001>
module attributes {stable_mosaic.version = 11 : i64} {
  func.func @qkv_rope_proj_kernel(%arg0: i32, %arg1: i32, %arg2: i32, %arg3: memref<1x8x64xf32, #tpu.memory_space<vmem>>, %arg4: memref<1x8x8xf32, #tpu.memory_space<vmem>>, %arg5: memref<1x8x8xf32, #tpu.memory_space<vmem>>, %arg6: memref<1x64x64xf32, #tpu.memory_space<vmem>>, %arg7: memref<1x64x64xf32, #tpu.memory_space<vmem>>, %arg8: memref<1x64x64xf32, #tpu.memory_space<vmem>>, %arg9: memref<1x4x8x16xf32, #tpu.memory_space<vmem>>, %arg10: memref<1x4x8x16xf32, #tpu.memory_space<vmem>>, %arg11: memref<1x4x8x16xf32, #tpu.memory_space<vmem>>) attributes {dimension_semantics = [#tpu.dimension_semantics<parallel>, #tpu.dimension_semantics<parallel>, #tpu.dimension_semantics<parallel>], iteration_bounds = array<i64: 1, 2, 1>, scalar_prefetch = 0 : i64, scratch_operands = 0 : i64, tpu.core_type = #tpu.core_type<tc>, window_params = [{transform_indices = @transform_0, window_bounds = array<i64: 1, 8, 64>}, {transform_indices = @transform_1, window_bounds = array<i64: 1, 8, 8>}, {transform_indices = @transform_2, window_bounds = array<i64: 1, 8, 8>}, {transform_indices = @transform_3, window_bounds = array<i64: 1, 64, 64>}, {transform_indices = @transform_4, window_bounds = array<i64: 1, 64, 64>}, {transform_indices = @transform_5, window_bounds = array<i64: 1, 64, 64>}, {transform_indices = @transform_6, window_bounds = array<i64: 1, 4, 8, 16>}, {transform_indices = @transform_7, window_bounds = array<i64: 1, 4, 8, 16>}, {transform_indices = @transform_8, window_bounds = array<i64: 1, 4, 8, 16>}]} {
    %c0 = arith.constant 0 : index
    %c0_0 = arith.constant 0 : index
    %c0_1 = arith.constant 0 : index
    %0 = vector.load %arg3[%c0, %c0_0, %c0_1] : memref<1x8x64xf32, #tpu.memory_space<vmem>>, vector<1x8x64xf32>
    %1 = vector.shape_cast %0 : vector<1x8x64xf32> to vector<8x64xf32>
    %c0_2 = arith.constant 0 : index
    %c0_3 = arith.constant 0 : index
    %c0_4 = arith.constant 0 : index
    %2 = vector.load %arg6[%c0_2, %c0_3, %c0_4] : memref<1x64x64xf32, #tpu.memory_space<vmem>>, vector<1x64x64xf32>
    %3 = vector.shape_cast %2 : vector<1x64x64xf32> to vector<64x64xf32>
    %cst = arith.constant dense<0.000000e+00> : vector<8x64xf32>
    %4 = tpu.matmul %1, %3, %cst {dimension_numbers = #tpu.dot_dimension_numbers<[1], [0], [0], [1], [0, 0, 1, 1], [], []>} : vector<8x64xf32>, vector<64x64xf32>, vector<8x64xf32> -> vector<8x64xf32>
    %c0_5 = arith.constant 0 : index
    %c0_6 = arith.constant 0 : index
    %c0_7 = arith.constant 0 : index
    %5 = vector.load %arg7[%c0_5, %c0_6, %c0_7] : memref<1x64x64xf32, #tpu.memory_space<vmem>>, vector<1x64x64xf32>
    %6 = vector.shape_cast %5 : vector<1x64x64xf32> to vector<64x64xf32>
    %cst_8 = arith.constant dense<0.000000e+00> : vector<8x64xf32>
    %7 = tpu.matmul %1, %6, %cst_8 {dimension_numbers = #tpu.dot_dimension_numbers<[1], [0], [0], [1], [0, 0, 1, 1], [], []>} : vector<8x64xf32>, vector<64x64xf32>, vector<8x64xf32> -> vector<8x64xf32>
    %c0_9 = arith.constant 0 : index
    %c0_10 = arith.constant 0 : index
    %c0_11 = arith.constant 0 : index
    %8 = vector.load %arg8[%c0_9, %c0_10, %c0_11] : memref<1x64x64xf32, #tpu.memory_space<vmem>>, vector<1x64x64xf32>
    %9 = vector.shape_cast %8 : vector<1x64x64xf32> to vector<64x64xf32>
    %cst_12 = arith.constant dense<0.000000e+00> : vector<8x64xf32>
    %10 = tpu.matmul %1, %9, %cst_12 {dimension_numbers = #tpu.dot_dimension_numbers<[1], [0], [0], [1], [0, 0, 1, 1], [], []>} : vector<8x64xf32>, vector<64x64xf32>, vector<8x64xf32> -> vector<8x64xf32>
    %c0_13 = arith.constant 0 : index
    %c0_14 = arith.constant 0 : index
    %c0_15 = arith.constant 0 : index
    %11 = vector.load %arg4[%c0_13, %c0_14, %c0_15] : memref<1x8x8xf32, #tpu.memory_space<vmem>>, vector<1x8x8xf32>
    %12 = vector.shape_cast %11 : vector<1x8x8xf32> to vector<8x8xf32>
    %c0_16 = arith.constant 0 : index
    %c0_17 = arith.constant 0 : index
    %c0_18 = arith.constant 0 : index
    %13 = vector.load %arg5[%c0_16, %c0_17, %c0_18] : memref<1x8x8xf32, #tpu.memory_space<vmem>>, vector<1x8x8xf32>
    %14 = vector.shape_cast %13 : vector<1x8x8xf32> to vector<8x8xf32>
    %15 = vector.extract_strided_slice %4 {offsets = [0, 0], sizes = [8, 8], strides = [1, 1]} : vector<8x64xf32> to vector<8x8xf32>
    %16 = vector.extract_strided_slice %4 {offsets = [0, 8], sizes = [8, 8], strides = [1, 1]} : vector<8x64xf32> to vector<8x8xf32>
    %17 = vector.extract_strided_slice %7 {offsets = [0, 0], sizes = [8, 8], strides = [1, 1]} : vector<8x64xf32> to vector<8x8xf32>
    %18 = vector.extract_strided_slice %7 {offsets = [0, 8], sizes = [8, 8], strides = [1, 1]} : vector<8x64xf32> to vector<8x8xf32>
    %19 = arith.mulf %15, %12 : vector<8x8xf32>
    %20 = arith.mulf %16, %14 : vector<8x8xf32>
    %21 = arith.subf %19, %20 : vector<8x8xf32>
    %22 = arith.mulf %16, %12 : vector<8x8xf32>
    %23 = arith.mulf %15, %14 : vector<8x8xf32>
    %24 = arith.addf %22, %23 : vector<8x8xf32>
    %25 = tpu.concatenate %21, %24 in 1 : vector<8x8xf32>, vector<8x8xf32> -> vector<8x16xf32>
    %cst_19 = arith.constant 2.500000e-01 : f32
    %26 = vector.broadcast %cst_19 : f32 to vector<8x16xf32>
    %27 = arith.mulf %25, %26 : vector<8x16xf32>
    %c0_20 = arith.constant 0 : index
    %c0_21 = arith.constant 0 : index
    %c0_22 = arith.constant 0 : index
    %c0_23 = arith.constant 0 : index
    %28 = vector.load %arg9[%c0_20, %c0_21, %c0_22, %c0_23] : memref<1x4x8x16xf32, #tpu.memory_space<vmem>>, vector<1x1x8x16xf32>
    %29 = vector.shape_cast %28 : vector<1x1x8x16xf32> to vector<8x16xf32>
    %30 = vector.shape_cast %27 : vector<8x16xf32> to vector<1x1x8x16xf32>
    tpu.vector_store %arg9[%c0_20, %c0_21, %c0_22, %c0_23], %30 {strides = array<i32>} : memref<1x4x8x16xf32, #tpu.memory_space<vmem>>, vector<1x1x8x16xf32>,
    %31 = arith.mulf %17, %12 : vector<8x8xf32>
    %32 = arith.mulf %18, %14 : vector<8x8xf32>
    %33 = arith.subf %31, %32 : vector<8x8xf32>
    %34 = arith.mulf %18, %12 : vector<8x8xf32>
    %35 = arith.mulf %17, %14 : vector<8x8xf32>
    %36 = arith.addf %34, %35 : vector<8x8xf32>
    %37 = tpu.concatenate %33, %36 in 1 : vector<8x8xf32>, vector<8x8xf32> -> vector<8x16xf32>
    %c0_24 = arith.constant 0 : index
    %c0_25 = arith.constant 0 : index
    %c0_26 = arith.constant 0 : index
    %c0_27 = arith.constant 0 : index
    %38 = vector.load %arg10[%c0_24, %c0_25, %c0_26, %c0_27] : memref<1x4x8x16xf32, #tpu.memory_space<vmem>>, vector<1x1x8x16xf32>
    %39 = vector.shape_cast %38 : vector<1x1x8x16xf32> to vector<8x16xf32>
    %40 = vector.shape_cast %37 : vector<8x16xf32> to vector<1x1x8x16xf32>
    tpu.vector_store %arg10[%c0_24, %c0_25, %c0_26, %c0_27], %40 {strides = array<i32>} : memref<1x4x8x16xf32, #tpu.memory_space<vmem>>, vector<1x1x8x16xf32>,
    %41 = vector.extract_strided_slice %10 {offsets = [0, 0], sizes = [8, 16], strides = [1, 1]} : vector<8x64xf32> to vector<8x16xf32>
    %c0_28 = arith.constant 0 : index
    %c0_29 = arith.constant 0 : index
    %c0_30 = arith.constant 0 : index
    %c0_31 = arith.constant 0 : index
    %42 = vector.load %arg11[%c0_28, %c0_29, %c0_30, %c0_31] : memref<1x4x8x16xf32, #tpu.memory_space<vmem>>, vector<1x1x8x16xf32>
    %43 = vector.shape_cast %42 : vector<1x1x8x16xf32> to vector<8x16xf32>
    %44 = vector.shape_cast %41 : vector<8x16xf32> to vector<1x1x8x16xf32>
    tpu.vector_store %arg11[%c0_28, %c0_29, %c0_30, %c0_31], %44 {strides = array<i32>} : memref<1x4x8x16xf32, #tpu.memory_space<vmem>>, vector<1x1x8x16xf32>,
    %45 = vector.extract_strided_slice %4 {offsets = [0, 16], sizes = [8, 8], strides = [1, 1]} : vector<8x64xf32> to vector<8x8xf32>
    %46 = vector.extract_strided_slice %4 {offsets = [0, 24], sizes = [8, 8], strides = [1, 1]} : vector<8x64xf32> to vector<8x8xf32>
    %47 = vector.extract_strided_slice %7 {offsets = [0, 16], sizes = [8, 8], strides = [1, 1]} : vector<8x64xf32> to vector<8x8xf32>
    %48 = vector.extract_strided_slice %7 {offsets = [0, 24], sizes = [8, 8], strides = [1, 1]} : vector<8x64xf32> to vector<8x8xf32>
    %49 = arith.mulf %45, %12 : vector<8x8xf32>
    %50 = arith.mulf %46, %14 : vector<8x8xf32>
    %51 = arith.subf %49, %50 : vector<8x8xf32>
    %52 = arith.mulf %46, %12 : vector<8x8xf32>
    %53 = arith.mulf %45, %14 : vector<8x8xf32>
    %54 = arith.addf %52, %53 : vector<8x8xf32>
    %55 = tpu.concatenate %51, %54 in 1 : vector<8x8xf32>, vector<8x8xf32> -> vector<8x16xf32>
    %cst_32 = arith.constant 2.500000e-01 : f32
    %56 = vector.broadcast %cst_32 : f32 to vector<8x16xf32>
    %57 = arith.mulf %55, %56 : vector<8x16xf32>
    %c0_33 = arith.constant 0 : index
    %c1 = arith.constant 1 : index
    %c0_34 = arith.constant 0 : index
    %c0_35 = arith.constant 0 : index
    %58 = vector.load %arg9[%c0_33, %c1, %c0_34, %c0_35] : memref<1x4x8x16xf32, #tpu.memory_space<vmem>>, vector<1x1x8x16xf32>
    %59 = vector.shape_cast %58 : vector<1x1x8x16xf32> to vector<8x16xf32>
    %60 = vector.shape_cast %57 : vector<8x16xf32> to vector<1x1x8x16xf32>
    tpu.vector_store %arg9[%c0_33, %c1, %c0_34, %c0_35], %60 {strides = array<i32>} : memref<1x4x8x16xf32, #tpu.memory_space<vmem>>, vector<1x1x8x16xf32>,
    %61 = arith.mulf %47, %12 : vector<8x8xf32>
    %62 = arith.mulf %48, %14 : vector<8x8xf32>
    %63 = arith.subf %61, %62 : vector<8x8xf32>
    %64 = arith.mulf %48, %12 : vector<8x8xf32>
    %65 = arith.mulf %47, %14 : vector<8x8xf32>
    %66 = arith.addf %64, %65 : vector<8x8xf32>
    %67 = tpu.concatenate %63, %66 in 1 : vector<8x8xf32>, vector<8x8xf32> -> vector<8x16xf32>
    %c0_36 = arith.constant 0 : index
    %c1_37 = arith.constant 1 : index
    %c0_38 = arith.constant 0 : index
    %c0_39 = arith.constant 0 : index
    %68 = vector.load %arg10[%c0_36, %c1_37, %c0_38, %c0_39] : memref<1x4x8x16xf32, #tpu.memory_space<vmem>>, vector<1x1x8x16xf32>
    %69 = vector.shape_cast %68 : vector<1x1x8x16xf32> to vector<8x16xf32>
    %70 = vector.shape_cast %67 : vector<8x16xf32> to vector<1x1x8x16xf32>
    tpu.vector_store %arg10[%c0_36, %c1_37, %c0_38, %c0_39], %70 {strides = array<i32>} : memref<1x4x8x16xf32, #tpu.memory_space<vmem>>, vector<1x1x8x16xf32>,
    %71 = vector.extract_strided_slice %10 {offsets = [0, 16], sizes = [8, 16], strides = [1, 1]} : vector<8x64xf32> to vector<8x16xf32>
    %c0_40 = arith.constant 0 : index
    %c1_41 = arith.constant 1 : index
    %c0_42 = arith.constant 0 : index
    %c0_43 = arith.constant 0 : index
    %72 = vector.load %arg11[%c0_40, %c1_41, %c0_42, %c0_43] : memref<1x4x8x16xf32, #tpu.memory_space<vmem>>, vector<1x1x8x16xf32>
    %73 = vector.shape_cast %72 : vector<1x1x8x16xf32> to vector<8x16xf32>
    %74 = vector.shape_cast %71 : vector<8x16xf32> to vector<1x1x8x16xf32>
    tpu.vector_store %arg11[%c0_40, %c1_41, %c0_42, %c0_43], %74 {strides = array<i32>} : memref<1x4x8x16xf32, #tpu.memory_space<vmem>>, vector<1x1x8x16xf32>,
    %75 = vector.extract_strided_slice %4 {offsets = [0, 32], sizes = [8, 8], strides = [1, 1]} : vector<8x64xf32> to vector<8x8xf32>
    %76 = vector.extract_strided_slice %4 {offsets = [0, 40], sizes = [8, 8], strides = [1, 1]} : vector<8x64xf32> to vector<8x8xf32>
    %77 = vector.extract_strided_slice %7 {offsets = [0, 32], sizes = [8, 8], strides = [1, 1]} : vector<8x64xf32> to vector<8x8xf32>
    %78 = vector.extract_strided_slice %7 {offsets = [0, 40], sizes = [8, 8], strides = [1, 1]} : vector<8x64xf32> to vector<8x8xf32>
    %79 = arith.mulf %75, %12 : vector<8x8xf32>
    %80 = arith.mulf %76, %14 : vector<8x8xf32>
    %81 = arith.subf %79, %80 : vector<8x8xf32>
    %82 = arith.mulf %76, %12 : vector<8x8xf32>
    %83 = arith.mulf %75, %14 : vector<8x8xf32>
    %84 = arith.addf %82, %83 : vector<8x8xf32>
    %85 = tpu.concatenate %81, %84 in 1 : vector<8x8xf32>, vector<8x8xf32> -> vector<8x16xf32>
    %cst_44 = arith.constant 2.500000e-01 : f32
    %86 = vector.broadcast %cst_44 : f32 to vector<8x16xf32>
    %87 = arith.mulf %85, %86 : vector<8x16xf32>
    %c0_45 = arith.constant 0 : index
    %c2 = arith.constant 2 : index
    %c0_46 = arith.constant 0 : index
    %c0_47 = arith.constant 0 : index
    %88 = vector.load %arg9[%c0_45, %c2, %c0_46, %c0_47] : memref<1x4x8x16xf32, #tpu.memory_space<vmem>>, vector<1x1x8x16xf32>
    %89 = vector.shape_cast %88 : vector<1x1x8x16xf32> to vector<8x16xf32>
    %90 = vector.shape_cast %87 : vector<8x16xf32> to vector<1x1x8x16xf32>
    tpu.vector_store %arg9[%c0_45, %c2, %c0_46, %c0_47], %90 {strides = array<i32>} : memref<1x4x8x16xf32, #tpu.memory_space<vmem>>, vector<1x1x8x16xf32>,
    %91 = arith.mulf %77, %12 : vector<8x8xf32>
    %92 = arith.mulf %78, %14 : vector<8x8xf32>
    %93 = arith.subf %91, %92 : vector<8x8xf32>
    %94 = arith.mulf %78, %12 : vector<8x8xf32>
    %95 = arith.mulf %77, %14 : vector<8x8xf32>
    %96 = arith.addf %94, %95 : vector<8x8xf32>
    %97 = tpu.concatenate %93, %96 in 1 : vector<8x8xf32>, vector<8x8xf32> -> vector<8x16xf32>
    %c0_48 = arith.constant 0 : index
    %c2_49 = arith.constant 2 : index
    %c0_50 = arith.constant 0 : index
    %c0_51 = arith.constant 0 : index
    %98 = vector.load %arg10[%c0_48, %c2_49, %c0_50, %c0_51] : memref<1x4x8x16xf32, #tpu.memory_space<vmem>>, vector<1x1x8x16xf32>
    %99 = vector.shape_cast %98 : vector<1x1x8x16xf32> to vector<8x16xf32>
    %100 = vector.shape_cast %97 : vector<8x16xf32> to vector<1x1x8x16xf32>
    tpu.vector_store %arg10[%c0_48, %c2_49, %c0_50, %c0_51], %100 {strides = array<i32>} : memref<1x4x8x16xf32, #tpu.memory_space<vmem>>, vector<1x1x8x16xf32>,
    %101 = vector.extract_strided_slice %10 {offsets = [0, 32], sizes = [8, 16], strides = [1, 1]} : vector<8x64xf32> to vector<8x16xf32>
    %c0_52 = arith.constant 0 : index
    %c2_53 = arith.constant 2 : index
    %c0_54 = arith.constant 0 : index
    %c0_55 = arith.constant 0 : index
    %102 = vector.load %arg11[%c0_52, %c2_53, %c0_54, %c0_55] : memref<1x4x8x16xf32, #tpu.memory_space<vmem>>, vector<1x1x8x16xf32>
    %103 = vector.shape_cast %102 : vector<1x1x8x16xf32> to vector<8x16xf32>
    %104 = vector.shape_cast %101 : vector<8x16xf32> to vector<1x1x8x16xf32>
    tpu.vector_store %arg11[%c0_52, %c2_53, %c0_54, %c0_55], %104 {strides = array<i32>} : memref<1x4x8x16xf32, #tpu.memory_space<vmem>>, vector<1x1x8x16xf32>,
    %105 = vector.extract_strided_slice %4 {offsets = [0, 48], sizes = [8, 8], strides = [1, 1]} : vector<8x64xf32> to vector<8x8xf32>
    %106 = vector.extract_strided_slice %4 {offsets = [0, 56], sizes = [8, 8], strides = [1, 1]} : vector<8x64xf32> to vector<8x8xf32>
    %107 = vector.extract_strided_slice %7 {offsets = [0, 48], sizes = [8, 8], strides = [1, 1]} : vector<8x64xf32> to vector<8x8xf32>
    %108 = vector.extract_strided_slice %7 {offsets = [0, 56], sizes = [8, 8], strides = [1, 1]} : vector<8x64xf32> to vector<8x8xf32>
    %109 = arith.mulf %105, %12 : vector<8x8xf32>
    %110 = arith.mulf %106, %14 : vector<8x8xf32>
    %111 = arith.subf %109, %110 : vector<8x8xf32>
    %112 = arith.mulf %106, %12 : vector<8x8xf32>
    %113 = arith.mulf %105, %14 : vector<8x8xf32>
    %114 = arith.addf %112, %113 : vector<8x8xf32>
    %115 = tpu.concatenate %111, %114 in 1 : vector<8x8xf32>, vector<8x8xf32> -> vector<8x16xf32>
    %cst_56 = arith.constant 2.500000e-01 : f32
    %116 = vector.broadcast %cst_56 : f32 to vector<8x16xf32>
    %117 = arith.mulf %115, %116 : vector<8x16xf32>
    %c0_57 = arith.constant 0 : index
    %c3 = arith.constant 3 : index
    %c0_58 = arith.constant 0 : index
    %c0_59 = arith.constant 0 : index
    %118 = vector.load %arg9[%c0_57, %c3, %c0_58, %c0_59] : memref<1x4x8x16xf32, #tpu.memory_space<vmem>>, vector<1x1x8x16xf32>
    %119 = vector.shape_cast %118 : vector<1x1x8x16xf32> to vector<8x16xf32>
    %120 = vector.shape_cast %117 : vector<8x16xf32> to vector<1x1x8x16xf32>
    tpu.vector_store %arg9[%c0_57, %c3, %c0_58, %c0_59], %120 {strides = array<i32>} : memref<1x4x8x16xf32, #tpu.memory_space<vmem>>, vector<1x1x8x16xf32>,
    %121 = arith.mulf %107, %12 : vector<8x8xf32>
    %122 = arith.mulf %108, %14 : vector<8x8xf32>
    %123 = arith.subf %121, %122 : vector<8x8xf32>
    %124 = arith.mulf %108, %12 : vector<8x8xf32>
    %125 = arith.mulf %107, %14 : vector<8x8xf32>
    %126 = arith.addf %124, %125 : vector<8x8xf32>
    %127 = tpu.concatenate %123, %126 in 1 : vector<8x8xf32>, vector<8x8xf32> -> vector<8x16xf32>
    %c0_60 = arith.constant 0 : index
    %c3_61 = arith.constant 3 : index
    %c0_62 = arith.constant 0 : index
    %c0_63 = arith.constant 0 : index
    %128 = vector.load %arg10[%c0_60, %c3_61, %c0_62, %c0_63] : memref<1x4x8x16xf32, #tpu.memory_space<vmem>>, vector<1x1x8x16xf32>
    %129 = vector.shape_cast %128 : vector<1x1x8x16xf32> to vector<8x16xf32>
    %130 = vector.shape_cast %127 : vector<8x16xf32> to vector<1x1x8x16xf32>
    tpu.vector_store %arg10[%c0_60, %c3_61, %c0_62, %c0_63], %130 {strides = array<i32>} : memref<1x4x8x16xf32, #tpu.memory_space<vmem>>, vector<1x1x8x16xf32>,
    %131 = vector.extract_strided_slice %10 {offsets = [0, 48], sizes = [8, 16], strides = [1, 1]} : vector<8x64xf32> to vector<8x16xf32>
    %c0_64 = arith.constant 0 : index
    %c3_65 = arith.constant 3 : index
    %c0_66 = arith.constant 0 : index
    %c0_67 = arith.constant 0 : index
    %132 = vector.load %arg11[%c0_64, %c3_65, %c0_66, %c0_67] : memref<1x4x8x16xf32, #tpu.memory_space<vmem>>, vector<1x1x8x16xf32>
    %133 = vector.shape_cast %132 : vector<1x1x8x16xf32> to vector<8x16xf32>
    %134 = vector.shape_cast %131 : vector<8x16xf32> to vector<1x1x8x16xf32>
    tpu.vector_store %arg11[%c0_64, %c3_65, %c0_66, %c0_67], %134 {strides = array<i32>} : memref<1x4x8x16xf32, #tpu.memory_space<vmem>>, vector<1x1x8x16xf32>,
    return
  }
  func.func @transform_0(%arg0: i32, %arg1: i32, %arg2: i32) -> (i32, i32, i32) {
    %c0_i32 = arith.constant 0 : i32
    %c0_i32_0 = arith.constant 0 : i32
    return %arg1, %arg2, %c0_i32 : i32, i32, i32
  }
  func.func @transform_1(%arg0: i32, %arg1: i32, %arg2: i32) -> (i32, i32, i32) {
    %c0_i32 = arith.constant 0 : i32
    %c0_i32_0 = arith.constant 0 : i32
    return %arg1, %arg2, %c0_i32 : i32, i32, i32
  }
  func.func @transform_2(%arg0: i32, %arg1: i32, %arg2: i32) -> (i32, i32, i32) {
    %c0_i32 = arith.constant 0 : i32
    %c0_i32_0 = arith.constant 0 : i32
    return %arg1, %arg2, %c0_i32 : i32, i32, i32
  }
  func.func @transform_3(%arg0: i32, %arg1: i32, %arg2: i32) -> (i32, i32, i32) {
    %c0_i32 = arith.constant 0 : i32
    %c0_i32_0 = arith.constant 0 : i32
    %c0_i32_1 = arith.constant 0 : i32
    return %arg0, %c0_i32, %c0_i32_0 : i32, i32, i32
  }
  func.func @transform_4(%arg0: i32, %arg1: i32, %arg2: i32) -> (i32, i32, i32) {
    %c0_i32 = arith.constant 0 : i32
    %c0_i32_0 = arith.constant 0 : i32
    %c0_i32_1 = arith.constant 0 : i32
    return %arg0, %c0_i32, %c0_i32_0 : i32, i32, i32
  }
  func.func @transform_5(%arg0: i32, %arg1: i32, %arg2: i32) -> (i32, i32, i32) {
    %c0_i32 = arith.constant 0 : i32
    %c0_i32_0 = arith.constant 0 : i32
    %c0_i32_1 = arith.constant 0 : i32
    return %arg0, %c0_i32, %c0_i32_0 : i32, i32, i32
  }
  func.func @transform_6(%arg0: i32, %arg1: i32, %arg2: i32) -> (i32, i32, i32, i32) {
    %c0_i32 = arith.constant 0 : i32
    %c0_i32_0 = arith.constant 0 : i32
    return %arg1, %arg0, %arg2, %c0_i32 : i32, i32, i32, i32
  }
  func.func @transform_7(%arg0: i32, %arg1: i32, %arg2: i32) -> (i32, i32, i32, i32) {
    %c0_i32 = arith.constant 0 : i32
    %c0_i32_0 = arith.constant 0 : i32
    return %arg1, %arg0, %arg2, %c0_i32 : i32, i32, i32, i32
  }
  func.func @transform_8(%arg0: i32, %arg1: i32, %arg2: i32) -> (i32, i32, i32, i32) {
    %c0_i32 = arith.constant 0 : i32
    %c0_i32_0 = arith.constant 0 : i32
    return %arg1, %arg0, %arg2, %c0_i32 : i32, i32, i32, i32
  }
}

</mosaic_0001>

<llo_original>
// kernel: tpu_custom_call.1
$region0: #{tpu_custom_call.1}
  #allocation0 [shape = 'u32[]', space=smem, size = 0x4, offset = 0x4, fixed_abs, tag = 'smem constant byte address 0x4 - core index']
  #allocation1 [shape = 'u32[144,128]{1,0:T(1,128)}', space=vmem, size = 0x12000, scoped, tag = 'internal scratch']
  %s0 = inlined_call_operand.hbm [shape: f32[2,8,64], index: 0, kind: input, shape index: {}]
  %s1 = inlined_call_operand.hbm [shape: f32[2,8,8], index: 1, kind: input, shape index: {}]
  %s2 = inlined_call_operand.hbm [shape: f32[2,8,8], index: 2, kind: input, shape index: {}]
  %s3 = inlined_call_operand.hbm [shape: f32[1,64,64], index: 3, kind: input, shape index: {}]
  %s4 = inlined_call_operand.hbm [shape: f32[1,64,64], index: 4, kind: input, shape index: {}]
  %s5 = inlined_call_operand.hbm [shape: f32[1,64,64], index: 5, kind: input, shape index: {}]
  %s6 = inlined_call_operand.hbm [shape: f32[2,4,8,16], index: 6, kind: output, shape index: {0}]
  %s7 = inlined_call_operand.hbm [shape: f32[2,4,8,16], index: 7, kind: output, shape index: {1}]
  %s8 = inlined_call_operand.hbm [shape: f32[2,4,8,16], index: 8, kind: output, shape index: {2}]
  %9 = xla_tuple %s6, %s7, %s8
  %s10 = sld [smem:[#allocation0]]
  $region97: #{tpu_custom_call.1} parent=0
    _
  %s12 = ssub.s32 1, %s10
  %s13 = scalar_select 0, %s12, %s10
  $region1: #{tpu_custom_call.1} parent=0
    #allocation2 [shape = 'u8[8192]{0}', space=vmem, size = 0x2000, scoped, tag = 'input window, operand 0']
    #allocation3 [shape = 's32[2]{0}', space=sflag, size = 0x8, scoped, tag = 'scoped memory for tpu_custom_call.1']
    #allocation4 [shape = 's32[2]{0}', space=sflag, size = 0x8, scoped, tag = 'scoped memory for tpu_custom_call.1']
    #allocation5 [shape = 'u8[8192]{0}', space=vmem, size = 0x2000, scoped, tag = 'input window, operand 1']
    #allocation6 [shape = 's32[2]{0}', space=sflag, size = 0x8, scoped, tag = 'scoped memory for tpu_custom_call.1']
    #allocation7 [shape = 'u8[8192]{0}', space=vmem, size = 0x2000, scoped, tag = 'input window, operand 2']
    #allocation8 [shape = 'u8[32768]{0}', space=vmem, size = 0x8000, scoped, tag = 'input window, operand 3, single buffered']
    #allocation9 [shape = 's32[1]{0}', space=sflag, size = 0x4, scoped, tag = 'scoped memory for tpu_custom_call.1']
    #allocation10 [shape = 'u8[32768]{0}', space=vmem, size = 0x8000, scoped, tag = 'input window, operand 4, single buffered']
    #allocation11 [shape = 'u8[32768]{0}', space=vmem, size = 0x8000, scoped, tag = 'input window, operand 5, single buffered']
    #allocation12 [shape = 's32[1]{0}', space=sflag, size = 0x4, scoped, tag = 'scoped memory for tpu_custom_call.1']
    #allocation13 [shape = 'u8[32768]{0}', space=vmem, size = 0x8000, scoped, tag = 'output window, operand 0']
    #allocation14 [shape = 'u8[32768]{0}', space=vmem, size = 0x8000, scoped, tag = 'output window, operand 1']
    #allocation15 [shape = 's32[2]{0}', space=sflag, size = 0x8, scoped, tag = 'scoped memory for tpu_custom_call.1']
    #allocation16 [shape = 'u8[32768]{0}', space=vmem, size = 0x8000, scoped, tag = 'output window, operand 2']
    %14 = vsyncpa [#allocation3], 0
    %s15 = scalar_lea.sflag [#allocation3], 1
    %16 = vsyncpa %s15, 0
    %17 = vsyncpa [#allocation6], 0
    %s18 = scalar_lea.sflag [#allocation6], 1
    %19 = vsyncpa %s18, 0
    %20 = vsyncpa [#allocation9], 0
    %21 = vsyncpa [#allocation12], 0
    %22 = vsyncpa [#allocation4], 0
    %s23 = scalar_lea.sflag [#allocation4], 1
    %24 = vsyncpa %s23, 0
    %25 = vsyncpa [#allocation15], 0
    %s26 = scalar_lea.sflag [#allocation15], 1
    %27 = vsyncpa %s26, 0
    loop: start=0, step=1, limit=4
    $region2: #{tpu_custom_call.1} parent=1 // loop_pre_header
      _
    $region3: #{tpu_custom_call.1} parent=1 // loop_header
      %s29 = sphi 0, %s33
      %p30 = scmp.ge.s32.totalorder %s29, 4
      %s36 = sphi 0, %s55
      %s37 = sphi 0, %s51
      %s38 = sphi 0, %s47
      %s39 = sphi 0, %s36
      %s40 = sphi 0, %s37
      %s41 = sphi 0, %s38
      %s42 = sphi 0, %s39
      %s43 = sphi 0, %s40
      %s44 = sphi 0, %s41
      %s60 = sphi 0, %s62
      %s63 = sphi 0, %s60
      %s64 = sphi 0, %s63
      %s80 = sphi 0, %s64
      %s88 = sphi 0, %s90
      %s91 = sphi 0, %s88
      %s92 = sphi 0, %s91
      %s108 = sphi 0, %s92
      %s116 = sphi 0, %s118
      %s119 = sphi 0, %s116
      %s120 = sphi 0, %s119
      %s136 = sphi 0, %s120
      %s142 = sphi 0, %s144
      %s145 = sphi 0, %s142
      %s146 = sphi 0, %s145
      %s162 = sphi 0, %s146
      %s168 = sphi 0, %s170
      %s171 = sphi 0, %s168
      %s172 = sphi 0, %s171
      %s188 = sphi 0, %s172
      %s194 = sphi 0, %s196
      %s197 = sphi 0, %s194
      %s198 = sphi 0, %s197
      %s214 = sphi 0, %s198
      %s224 = sphi 0, %s226
      %s227 = sphi 0, %s224
      %s228 = sphi 0, %s227
      %s244 = sphi 0, %s228
      %s254 = sphi 0, %s256
      %s257 = sphi 0, %s254
      %s258 = sphi 0, %s257
      %s274 = sphi 0, %s258
      %s284 = sphi 0, %s286
      %s287 = sphi 0, %s284
      %s288 = sphi 0, %s287
      %s304 = sphi 0, %s288
    $region4: #{tpu_custom_call.1} parent=1 // loop_header_branch
      %32 = sbr.rel (%p30) target = $region8
    $region5: #{tpu_custom_call.1} parent=1 // loop_body
      %s34 = ssub.s32 %s29, 1
      %s35 = ssub.s32 %s29, 2
      %s45 = sadd.s32 1, %s38
      %p46 = scmp.ge.s32.totalorder %s45, 1
      %s47 = scalar_select %p46, 0, %s45
      %s48 = sadd.s32 1, %s37
      %s49 = scalar_select %p46, %s48, %s37
      %p50 = scmp.ge.s32.totalorder %s49, 2
      %s51 = scalar_select %p50, 0, %s49
      %s52 = sadd.s32 1, %s36
      %s53 = scalar_select %p50, %s52, %s36
      %p54 = scmp.ge.s32.totalorder %s53, 1
      %s55 = scalar_select %p54, 0, %s53
      %s56 = ssub.s32 %s37, %s51
      %s57 = ssub.s32 %s38, %s47
      %s58 = sor.u32 %s56, %s57
      %p59 = scmp.eq.s32.totalorder %s58, 0
      %s61 = sadd.s32 %s60, 1
      %s62 = scalar_select %p59, %s60, %s61
      %p65 = pneg %p59
      %p66 = scmp.eq.s32.totalorder %s29, 1
      %p67 = por %p65, %p66
      %p68 = scmp.ne.s32.totalorder %s60, %s63
      %p69 = scmp.eq.s32.totalorder %s29, 0
      %p70 = por %p68, %p69
      %p71 = scmp.ne.s32.totalorder %s60, %s63
      %p72 = scmp.eq.s32.totalorder %s34, 1
      %p73 = por %p71, %p72
      %p74 = scmp.ne.s32.totalorder %s63, %s64
      %p75 = scmp.eq.s32.totalorder %s34, 0
      %p76 = por %p74, %p75
      %p77 = scmp.ne.s32.totalorder %s63, %s64
      %p78 = scmp.eq.s32.totalorder %s35, 1
      %p79 = por %p77, %p78
      %p81 = scmp.ne.s32.totalorder %s64, %s80
      %p82 = scmp.eq.s32.totalorder %s35, 0
      %p83 = por %p81, %p82
      %s84 = ssub.s32 %s37, %s51
      %s85 = ssub.s32 %s38, %s47
      %s86 = sor.u32 %s84, %s85
      %p87 = scmp.eq.s32.totalorder %s86, 0
      %s89 = sadd.s32 %s88, 1
      %s90 = scalar_select %p87, %s88, %s89
      %p93 = pneg %p87
      %p94 = scmp.eq.s32.totalorder %s29, 1
      %p95 = por %p93, %p94
      %p96 = scmp.ne.s32.totalorder %s88, %s91
      %p97 = scmp.eq.s32.totalorder %s29, 0
      %p98 = por %p96, %p97
      %p99 = scmp.ne.s32.totalorder %s88, %s91
      %p100 = scmp.eq.s32.totalorder %s34, 1
      %p101 = por %p99, %p100
      %p102 = scmp.ne.s32.totalorder %s91, %s92
      %p103 = scmp.eq.s32.totalorder %s34, 0
      %p104 = por %p102, %p103
      %p105 = scmp.ne.s32.totalorder %s91, %s92
      %p106 = scmp.eq.s32.totalorder %s35, 1
      %p107 = por %p105, %p106
      %p109 = scmp.ne.s32.totalorder %s92, %s108
      %p110 = scmp.eq.s32.totalorder %s35, 0
      %p111 = por %p109, %p110
      %s112 = ssub.s32 %s37, %s51
      %s113 = ssub.s32 %s38, %s47
      %s114 = sor.u32 %s112, %s113
      %p115 = scmp.eq.s32.totalorder %s114, 0
      %s117 = sadd.s32 %s116, 1
      %s118 = scalar_select %p115, %s116, %s117
      %p121 = pneg %p115
      %p122 = scmp.eq.s32.totalorder %s29, 1
      %p123 = por %p121, %p122
      %p124 = scmp.ne.s32.totalorder %s116, %s119
      %p125 = scmp.eq.s32.totalorder %s29, 0
      %p126 = por %p124, %p125
      %p127 = scmp.ne.s32.totalorder %s116, %s119
      %p128 = scmp.eq.s32.totalorder %s34, 1
      %p129 = por %p127, %p128
      %p130 = scmp.ne.s32.totalorder %s119, %s120
      %p131 = scmp.eq.s32.totalorder %s34, 0
      %p132 = por %p130, %p131
      %p133 = scmp.ne.s32.totalorder %s119, %s120
      %p134 = scmp.eq.s32.totalorder %s35, 1
      %p135 = por %p133, %p134
      %p137 = scmp.ne.s32.totalorder %s120, %s136
      %p138 = scmp.eq.s32.totalorder %s35, 0
      %p139 = por %p137, %p138
      %s140 = ssub.s32 %s36, %s55
      %p141 = scmp.eq.s32.totalorder %s140, 0
      %s143 = sadd.s32 %s142, 1
      %s144 = scalar_select %p141, %s142, %s143
      %p147 = pneg %p141
      %p148 = scmp.eq.s32.totalorder %s29, 1
      %p149 = por %p147, %p148
      %p150 = scmp.ne.s32.totalorder %s142, %s145
      %p151 = scmp.eq.s32.totalorder %s29, 0
      %p152 = por %p150, %p151
      %p153 = scmp.ne.s32.totalorder %s142, %s145
      %p154 = scmp.eq.s32.totalorder %s34, 1
      %p155 = por %p153, %p154
      %p156 = scmp.ne.s32.totalorder %s145, %s146
      %p157 = scmp.eq.s32.totalorder %s34, 0
      %p158 = por %p156, %p157
      %p159 = scmp.ne.s32.totalorder %s145, %s146
      %p160 = scmp.eq.s32.totalorder %s35, 1
      %p161 = por %p159, %p160
      %p163 = scmp.ne.s32.totalorder %s146, %s162
      %p164 = scmp.eq.s32.totalorder %s35, 0
      %p165 = por %p163, %p164
      %s166 = ssub.s32 %s36, %s55
      %p167 = scmp.eq.s32.totalorder %s166, 0
      %s169 = sadd.s32 %s168, 1
      %s170 = scalar_select %p167, %s168, %s169
      %p173 = pneg %p167
      %p174 = scmp.eq.s32.totalorder %s29, 1
      %p175 = por %p173, %p174
      %p176 = scmp.ne.s32.totalorder %s168, %s171
      %p177 = scmp.eq.s32.totalorder %s29, 0
      %p178 = por %p176, %p177
      %p179 = scmp.ne.s32.totalorder %s168, %s171
      %p180 = scmp.eq.s32.totalorder %s34, 1
      %p181 = por %p179, %p180
      %p182 = scmp.ne.s32.totalorder %s171, %s172
      %p183 = scmp.eq.s32.totalorder %s34, 0
      %p184 = por %p182, %p183
      %p185 = scmp.ne.s32.totalorder %s171, %s172
      %p186 = scmp.eq.s32.totalorder %s35, 1
      %p187 = por %p185, %p186
      %p189 = scmp.ne.s32.totalorder %s172, %s188
      %p190 = scmp.eq.s32.totalorder %s35, 0
      %p191 = por %p189, %p190
      %s192 = ssub.s32 %s36, %s55
      %p193 = scmp.eq.s32.totalorder %s192, 0
      %s195 = sadd.s32 %s194, 1
      %s196 = scalar_select %p193, %s194, %s195
      %p199 = pneg %p193
      %p200 = scmp.eq.s32.totalorder %s29, 1
      %p201 = por %p199, %p200
      %p202 = scmp.ne.s32.totalorder %s194, %s197
      %p203 = scmp.eq.s32.totalorder %s29, 0
      %p204 = por %p202, %p203
      %p205 = scmp.ne.s32.totalorder %s194, %s197
      %p206 = scmp.eq.s32.totalorder %s34, 1
      %p207 = por %p205, %p206
      %p208 = scmp.ne.s32.totalorder %s197, %s198
      %p209 = scmp.eq.s32.totalorder %s34, 0
      %p210 = por %p208, %p209
      %p211 = scmp.ne.s32.totalorder %s197, %s198
      %p212 = scmp.eq.s32.totalorder %s35, 1
      %p213 = por %p211, %p212
      %p215 = scmp.ne.s32.totalorder %s198, %s214
      %p216 = scmp.eq.s32.totalorder %s35, 0
      %p217 = por %p215, %p216
      %s218 = ssub.s32 %s37, %s51
      %s219 = ssub.s32 %s36, %s55
      %s220 = sor.u32 %s218, %s219
      %s221 = ssub.s32 %s38, %s47
      %s222 = sor.u32 %s220, %s221
      %p223 = scmp.eq.s32.totalorder %s222, 0
      %s225 = sadd.s32 %s224, 1
      %s226 = scalar_select %p223, %s224, %s225
      %p229 = pneg %p223
      %p230 = scmp.eq.s32.totalorder %s29, 1
      %p231 = por %p229, %p230
      %p232 = scmp.ne.s32.totalorder %s224, %s227
      %p233 = scmp.eq.s32.totalorder %s29, 0
      %p234 = por %p232, %p233
      %p235 = scmp.ne.s32.totalorder %s224, %s227
      %p236 = scmp.eq.s32.totalorder %s34, 1
      %p237 = por %p235, %p236
      %p238 = scmp.ne.s32.totalorder %s227, %s228
      %p239 = scmp.eq.s32.totalorder %s34, 0
      %p240 = por %p238, %p239
      %p241 = scmp.ne.s32.totalorder %s227, %s228
      %p242 = scmp.eq.s32.totalorder %s35, 1
      %p243 = por %p241, %p242
      %p245 = scmp.ne.s32.totalorder %s228, %s244
      %p246 = scmp.eq.s32.totalorder %s35, 0
      %p247 = por %p245, %p246
      %s248 = ssub.s32 %s37, %s51
      %s249 = ssub.s32 %s36, %s55
      %s250 = sor.u32 %s248, %s249
      %s251 = ssub.s32 %s38, %s47
      %s252 = sor.u32 %s250, %s251
      %p253 = scmp.eq.s32.totalorder %s252, 0
      %s255 = sadd.s32 %s254, 1
      %s256 = scalar_select %p253, %s254, %s255
      %p259 = pneg %p253
      %p260 = scmp.eq.s32.totalorder %s29, 1
      %p261 = por %p259, %p260
      %p262 = scmp.ne.s32.totalorder %s254, %s257
      %p263 = scmp.eq.s32.totalorder %s29, 0
      %p264 = por %p262, %p263
      %p265 = scmp.ne.s32.totalorder %s254, %s257
      %p266 = scmp.eq.s32.totalorder %s34, 1
      %p267 = por %p265, %p266
      %p268 = scmp.ne.s32.totalorder %s257, %s258
      %p269 = scmp.eq.s32.totalorder %s34, 0
      %p270 = por %p268, %p269
      %p271 = scmp.ne.s32.totalorder %s257, %s258
      %p272 = scmp.eq.s32.totalorder %s35, 1
      %p273 = por %p271, %p272
      %p275 = scmp.ne.s32.totalorder %s258, %s274
      %p276 = scmp.eq.s32.totalorder %s35, 0
      %p277 = por %p275, %p276
      %s278 = ssub.s32 %s37, %s51
      %s279 = ssub.s32 %s36, %s55
      %s280 = sor.u32 %s278, %s279
      %s281 = ssub.s32 %s38, %s47
      %s282 = sor.u32 %s280, %s281
      %p283 = scmp.eq.s32.totalorder %s282, 0
      %s285 = sadd.s32 %s284, 1
      %s286 = scalar_select %p283, %s284, %s285
      %p289 = pneg %p283
      %p290 = scmp.eq.s32.totalorder %s29, 1
      %p291 = por %p289, %p290
      %p292 = scmp.ne.s32.totalorder %s284, %s287
      %p293 = scmp.eq.s32.totalorder %s29, 0
      %p294 = por %p292, %p293
      %p295 = scmp.ne.s32.totalorder %s284, %s287
      %p296 = scmp.eq.s32.totalorder %s34, 1
      %p297 = por %p295, %p296
      %p298 = scmp.ne.s32.totalorder %s287, %s288
      %p299 = scmp.eq.s32.totalorder %s34, 0
      %p300 = por %p298, %p299
      %p301 = scmp.ne.s32.totalorder %s287, %s288
      %p302 = scmp.eq.s32.totalorder %s35, 1
      %p303 = por %p301, %p302
      %p305 = scmp.ne.s32.totalorder %s288, %s304
      %p306 = scmp.eq.s32.totalorder %s35, 0
      %p307 = por %p305, %p306
      %p308 = scmp.le.s32.totalorder 1, %s29
      %p309 = scmp.lt.s32.totalorder %s29, 3
      %p310 = pnand %p308, %p309
      %p311 = pneg %p310
      // Predicated region
      $region9: #{tpu_custom_call.1} parent=5 // pred_check
        _
      $region10: #{tpu_custom_call.1} parent=5 // pred_check_branch
        %313 = sbr.rel (%p310) target = $region12
      $region11: #{tpu_custom_call.1} parent=5 // pred_region
        %s314 = ssub.s32 %s29, 1
        // Predicated region
        $region13: #{tpu_custom_call.1} parent=11 // pred_check
          %p315 = pneg %p158
        $region14: #{tpu_custom_call.1} parent=11 // pred_check_branch
          %317 = sbr.rel (%p315) target = $region16
        $region15: #{tpu_custom_call.1} parent=11 // pred_region
          %s319 = ssub.s32 1024, 1024
          %320 = vsyncadd [#allocation9], %s319
          %s321 = smul.addr %s39, 8
          %s322 = smul.addr %s321, 128
          %s323 = scalar_lea.hbm %s3, %s322
          %s324 = sshll.u32 [#allocation8], 4
          %s325 = int_to_ptr.vmem [resolvable:$true] %s324
          %330 = dma.hbm_to_vmem [thread:$0]  %s323, 1024, %s325, [#allocation9], 128, 128, 8
        $region16: #{tpu_custom_call.1} parent=11 // pred_fallthru
          _
        // Predicated region
        $region17: #{tpu_custom_call.1} parent=11 // pred_check
          %p331 = pneg %p184
        $region18: #{tpu_custom_call.1} parent=11 // pred_check_branch
          %333 = sbr.rel (%p331) target = $region20
        $region19: #{tpu_custom_call.1} parent=11 // pred_region
          %s335 = ssub.s32 1024, 1024
          %336 = vsyncadd [#allocation9], %s335
          %s337 = smul.addr %s39, 8
          %s338 = smul.addr %s337, 128
          %s339 = scalar_lea.hbm %s4, %s338
          %s340 = sshll.u32 [#allocation10], 4
          %s341 = int_to_ptr.vmem [resolvable:$true] %s340
          %346 = dma.hbm_to_vmem [thread:$0]  %s339, 1024, %s341, [#allocation9], 128, 128, 8
        $region20: #{tpu_custom_call.1} parent=11 // pred_fallthru
          _
        // Predicated region
        $region21: #{tpu_custom_call.1} parent=11 // pred_check
          %p347 = pneg %p210
        $region22: #{tpu_custom_call.1} parent=11 // pred_check_branch
          %349 = sbr.rel (%p347) target = $region24
        $region23: #{tpu_custom_call.1} parent=11 // pred_region
          %s351 = ssub.s32 1024, 1024
          %352 = vsyncadd [#allocation12], %s351
          %s353 = smul.addr %s39, 8
          %s354 = smul.addr %s353, 128
          %s355 = scalar_lea.hbm %s5, %s354
          %s356 = sshll.u32 [#allocation11], 4
          %s357 = int_to_ptr.vmem [resolvable:$true] %s356
          %362 = dma.hbm_to_vmem [thread:$0]  %s355, 1024, %s357, [#allocation12], 128, 128, 8
        $region24: #{tpu_custom_call.1} parent=11 // pred_fallthru
          _
      $region12: #{tpu_custom_call.1} parent=5 // pred_fallthru
        _
      %p363 = scmp.lt.s32.totalorder %s29, 2
      // Predicated region
      $region25: #{tpu_custom_call.1} parent=5 // pred_check
        %p364 = pneg %p363
      $region26: #{tpu_custom_call.1} parent=5 // pred_check_branch
        %366 = sbr.rel (%p364) target = $region28
      $region27: #{tpu_custom_call.1} parent=5 // pred_region
        // Predicated region
        $region29: #{tpu_custom_call.1} parent=27 // pred_check
          %p367 = pneg %p70
        $region30: #{tpu_custom_call.1} parent=27 // pred_check_branch
          %369 = sbr.rel (%p367) target = $region32
        $region31: #{tpu_custom_call.1} parent=27 // pred_region
          %s370 = sand.u32 %s60, 1
          %s371 = scalar_lea.sflag [#allocation3], %s370
          %s372 = sand.u32 %s60, 1
          %s373 = smul.addr %s372, 8
          %s374 = scalar_lea.vmem [#allocation2], %s373
          %s376 = ssub.s32 128, 128
          %377 = vsyncadd %s371, %s376
          %s378 = sadd.s32 %s38, %s37
          %s379 = smul.addr %s378, 128
          %s380 = scalar_lea.hbm %s0, %s379
          %s382 = sshll.u32 %s374, 4
          %s383 = int_to_ptr.vmem [resolvable:$true] %s382
          %385 = dma.hbm_to_vmem [thread:$0]  %s380, 128, %s383, %s371
        $region32: #{tpu_custom_call.1} parent=27 // pred_fallthru
          _
        // Predicated region
        $region33: #{tpu_custom_call.1} parent=27 // pred_check
          %p386 = pneg %p98
        $region34: #{tpu_custom_call.1} parent=27 // pred_check_branch
          %388 = sbr.rel (%p386) target = $region36
        $region35: #{tpu_custom_call.1} parent=27 // pred_region
          %s389 = sand.u32 %s29, 1
          %s390 = scalar_lea.sflag [#allocation6], %s389
          %s391 = sand.u32 %s88, 1
          %s392 = smul.addr %s391, 8
          %s393 = scalar_lea.vmem [#allocation5], %s392
          %s395 = ssub.s32 128, 128
          %396 = vsyncadd %s390, %s395
          %s397 = sadd.s32 %s38, %s37
          %s398 = smul.addr %s397, 128
          %s399 = scalar_lea.hbm %s1, %s398
          %s401 = sshll.u32 %s393, 4
          %s402 = int_to_ptr.vmem [resolvable:$true] %s401
          %404 = dma.hbm_to_vmem [thread:$0]  %s399, 128, %s402, %s390
        $region36: #{tpu_custom_call.1} parent=27 // pred_fallthru
          _
        // Predicated region
        $region37: #{tpu_custom_call.1} parent=27 // pred_check
          %p405 = pneg %p126
        $region38: #{tpu_custom_call.1} parent=27 // pred_check_branch
          %407 = sbr.rel (%p405) target = $region40
        $region39: #{tpu_custom_call.1} parent=27 // pred_region
          %s408 = sand.u32 %s29, 1
          %s409 = scalar_lea.sflag [#allocation6], %s408
          %s410 = sand.u32 %s116, 1
          %s411 = smul.addr %s410, 8
          %s412 = scalar_lea.vmem [#allocation7], %s411
          %s414 = ssub.s32 128, 128
          %415 = vsyncadd %s409, %s414
          %s416 = sadd.s32 %s38, %s37
          %s417 = smul.addr %s416, 128
          %s418 = scalar_lea.hbm %s2, %s417
          %s420 = sshll.u32 %s412, 4
          %s421 = int_to_ptr.vmem [resolvable:$true] %s420
          %423 = dma.hbm_to_vmem [thread:$0]  %s418, 128, %s421, %s409
        $region40: #{tpu_custom_call.1} parent=27 // pred_fallthru
          _
      $region28: #{tpu_custom_call.1} parent=5 // pred_fallthru
        _
      %p424 = scmp.le.s32.totalorder 1, %s29
      %p425 = scmp.lt.s32.totalorder %s29, 3
      %p426 = pnand %p424, %p425
      %p427 = pneg %p426
      // Predicated region
      $region41: #{tpu_custom_call.1} parent=5 // pred_check
        _
      $region42: #{tpu_custom_call.1} parent=5 // pred_check_branch
        %429 = sbr.rel (%p426) target = $region44
      $region43: #{tpu_custom_call.1} parent=5 // pred_region
        %s430 = ssub.s32 %s29, 1
        %s431 = sand.u32 %s63, 1
        %s432 = scalar_lea.sflag [#allocation3], %s431
        %s433 = sand.u32 %s63, 1
        %s434 = smul.addr %s433, 8
        %s435 = scalar_lea.vmem [#allocation2], %s434
        // Predicated region
        $region45: #{tpu_custom_call.1} parent=43 // pred_check
          %p436 = pneg %p76
        $region46: #{tpu_custom_call.1} parent=43 // pred_check_branch
          %438 = sbr.rel (%p436) target = $region48
        $region47: #{tpu_custom_call.1} parent=43 // pred_region
          %439 = dma.done %s432, 128
        $region48: #{tpu_custom_call.1} parent=43 // pred_fallthru
          _
        %s440 = sand.u32 %s34, 1
        %s441 = scalar_lea.sflag [#allocation6], %s440
        %s442 = sand.u32 %s91, 1
        %s443 = smul.addr %s442, 8
        %s444 = scalar_lea.vmem [#allocation5], %s443
        // Predicated region
        $region49: #{tpu_custom_call.1} parent=43 // pred_check
          %p445 = pneg %p104
        $region50: #{tpu_custom_call.1} parent=43 // pred_check_branch
          %447 = sbr.rel (%p445) target = $region52
        $region51: #{tpu_custom_call.1} parent=43 // pred_region
          %448 = dma.done %s441, 128
        $region52: #{tpu_custom_call.1} parent=43 // pred_fallthru
          _
        %s449 = sand.u32 %s34, 1
        %s450 = scalar_lea.sflag [#allocation6], %s449
        %s451 = sand.u32 %s119, 1
        %s452 = smul.addr %s451, 8
        %s453 = scalar_lea.vmem [#allocation7], %s452
        // Predicated region
        $region53: #{tpu_custom_call.1} parent=43 // pred_check
          %p454 = pneg %p132
        $region54: #{tpu_custom_call.1} parent=43 // pred_check_branch
          %456 = sbr.rel (%p454) target = $region56
        $region55: #{tpu_custom_call.1} parent=43 // pred_region
          %457 = dma.done %s450, 128
        $region56: #{tpu_custom_call.1} parent=43 // pred_fallthru
          _
        // Predicated region
        $region57: #{tpu_custom_call.1} parent=43 // pred_check
          %p458 = pneg %p158
        $region58: #{tpu_custom_call.1} parent=43 // pred_check_branch
          %460 = sbr.rel (%p458) target = $region60
        $region59: #{tpu_custom_call.1} parent=43 // pred_region
          %461 = dma.done [#allocation9], 1024
        $region60: #{tpu_custom_call.1} parent=43 // pred_fallthru
          _
        // Predicated region
        $region61: #{tpu_custom_call.1} parent=43 // pred_check
          %p462 = pneg %p184
        $region62: #{tpu_custom_call.1} parent=43 // pred_check_branch
          %464 = sbr.rel (%p462) target = $region64
        $region63: #{tpu_custom_call.1} parent=43 // pred_region
          %465 = dma.done [#allocation9], 1024
        $region64: #{tpu_custom_call.1} parent=43 // pred_fallthru
          _
        // Predicated region
        $region65: #{tpu_custom_call.1} parent=43 // pred_check
          %p466 = pneg %p210
        $region66: #{tpu_custom_call.1} parent=43 // pred_check_branch
          %468 = sbr.rel (%p466) target = $region68
        $region67: #{tpu_custom_call.1} parent=43 // pred_region
          %469 = dma.done [#allocation12], 1024
        $region68: #{tpu_custom_call.1} parent=43 // pred_fallthru
          _
        %s470 = sand.u32 %s63, 1
        %s471 = scalar_lea.sflag [#allocation3], %s470
        %s472 = sand.u32 %s63, 1
        %s473 = smul.addr %s472, 8
        %s474 = scalar_lea.vmem [#allocation2], %s473
        %p475 = pneg %p76
        %p476 = pneg %p73
        %s477 = sand.u32 %s34, 1
        %s478 = scalar_lea.sflag [#allocation6], %s477
        %s479 = sand.u32 %s91, 1
        %s480 = smul.addr %s479, 8
        %s481 = scalar_lea.vmem [#allocation5], %s480
        %p482 = pneg %p104
        %p483 = pneg %p101
        %s484 = sand.u32 %s34, 1
        %s485 = scalar_lea.sflag [#allocation6], %s484
        %s486 = sand.u32 %s119, 1
        %s487 = smul.addr %s486, 8
        %s488 = scalar_lea.vmem [#allocation7], %s487
        %p489 = pneg %p132
        %p490 = pneg %p129
        %p491 = pneg %p158
        %p492 = pneg %p155
        %p493 = pneg %p184
        %p494 = pneg %p181
        %p495 = pneg %p210
        %p496 = pneg %p207
        %p497 = pneg %p240
        %p498 = pneg %p237
        %s499 = sand.u32 %s227, 1
        %s500 = scalar_lea.sflag [#allocation4], %s499
        %s501 = sand.u32 %s227, 1
        %s502 = smul.addr %s501, 32
        %s503 = scalar_lea.vmem [#allocation13], %s502
        %p504 = pneg %p270
        %p505 = pneg %p267
        %s506 = sand.u32 %s34, 1
        %s507 = scalar_lea.sflag [#allocation15], %s506
        %s508 = sand.u32 %s257, 1
        %s509 = smul.addr %s508, 32
        %s510 = scalar_lea.vmem [#allocation14], %s509
        %p511 = pneg %p300
        %p512 = pneg %p297
        %s513 = sand.u32 %s34, 1
        %s514 = scalar_lea.sflag [#allocation15], %s513
        %s515 = sand.u32 %s287, 1
        %s516 = smul.addr %s515, 32
        %s517 = scalar_lea.vmem [#allocation16], %s516
        %s518 = smul.u32 4, %s39
        %s519 = smul.u32 4, %s39
        %s520 = smul.u32 4, %s39
        %v521 = vld [vmem:[%s435] sm:$0xff]
        %v522 = vld [vmem:[#allocation8] sm:$0xff]
        %v523 = vld [vmem:[#allocation8 + $0x8] sm:$0xff]
        %v524 = vld [vmem:[#allocation8 + $0x10] sm:$0xff]
        %v525 = vld [vmem:[#allocation8 + $0x18] sm:$0xff]
        %v526 = vld [vmem:[#allocation8 + $0x20] sm:$0xff]
        %v527 = vld [vmem:[#allocation8 + $0x28] sm:$0xff]
        %v528 = vld [vmem:[#allocation8 + $0x30] sm:$0xff]
        %v529 = vld [vmem:[#allocation8 + $0x38] sm:$0xff]
        %vm530 = vcmask 523264
        %v532 = vsel %vm530, %v521, 0
        %534 = vmatprep.subr.mxu0 0.0
        %535 = vmatpush1.msra.mxu0 %v522
        %536 = vmatprep.subr.mxu0 0.0
        %537 = vmatpush1.msra.mxu0 %v523
        %538 = vmatprep.subr.mxu0 0.0
        %539 = vmatpush1.msra.mxu0 %v524
        %540 = vmatprep.subr.mxu0 0.0
        %541 = vmatpush1.msra.mxu0 %v525
        %542 = vmatprep.subr.mxu0 0.0
        %543 = vmatpush1.msra.mxu0 %v526
        %544 = vmatprep.subr.mxu0 0.0
        %545 = vmatpush1.msra.mxu0 %v527
        %546 = vmatprep.subr.mxu0 0.0
        %547 = vmatpush1.msra.mxu0 %v528
        %548 = vmatprep.subr.mxu0 0.0
        %549 = vmatpush1.msra.mxu0 %v529
        %550 = vmatprep.subr.mxu0 0.0
        %551 = vmatpush1.msra.mxu0 0.0
        %552 = vmatprep.subr.mxu0 0.0
        %553 = vmatpush1.msra.mxu0 0.0
        %554 = vmatprep.subr.mxu0 0.0
        %555 = vmatpush1.msra.mxu0 0.0
        %556 = vmatprep.subr.mxu0 0.0
        %557 = vmatpush1.msra.mxu0 0.0
        %558 = vmatprep.subr.mxu0 0.0
        %559 = vmatpush1.msra.mxu0 0.0
        %560 = vmatprep.subr.mxu0 0.0
        %561 = vmatpush1.msra.mxu0 0.0
        %562 = vmatprep.subr.mxu0 0.0
        %563 = vmatpush1.msra.mxu0 0.0
        %564 = vmatprep.subr.mxu0 0.0
        %565 = vmatpush1.msra.mxu0 0.0
        %566 = vmatprep.subr.mxu0 0.0
        %567 = vmatpush1.msra.mxu0 0.0
        %568 = vmatprep.subr.mxu0 0.0
        %569 = vmatpush1.msra.mxu0 0.0
        %570 = vmatprep.subr.mxu0 0.0
        %571 = vmatpush1.msra.mxu0 0.0
        %572 = vmatprep.subr.mxu0 0.0
        %573 = vmatpush1.msra.mxu0 0.0
        %574 = vmatprep.subr.mxu0 0.0
        %575 = vmatpush1.msra.mxu0 0.0
        %576 = vmatprep.subr.mxu0 0.0
        %577 = vmatpush1.msra.mxu0 0.0
        %578 = vmatprep.subr.mxu0 0.0
        %579 = vmatpush1.msra.mxu0 0.0
        %580 = vmatprep.subr.mxu0 0.0
        %581 = vmatpush1.msra.mxu0 0.0
        %582 = vmatprep.subr.mxu0 0.0
        %583 = vmatpush1.msra.mxu0 0.0
        %584 = vmatprep.subr.mxu0 0.0
        %585 = vmatpush1.msra.mxu0 0.0
        %586 = vmatprep.subr.mxu0 0.0
        %587 = vmatpush1.msra.mxu0 0.0
        %588 = vmatprep.subr.mxu0 0.0
        %589 = vmatpush1.msra.mxu0 0.0
        %590 = vmatprep.subr.mxu0 0.0
        %591 = vmatpush1.msra.mxu0 0.0
        %592 = vmatprep.subr.mxu0 0.0
        %593 = vmatpush1.msra.mxu0 0.0
        %594 = vmatprep.subr.mxu0 0.0
        %595 = vmatpush1.msra.mxu0 0.0
        %596 = vmatprep.subr.mxu0 0.0
        %597 = vmatpush1.msra.mxu0 0.0
        %598 = vmatprep.mubr.f32.mxu0 0.0
        %599 = vmatmul.mubr.f32.gmra.mrb[0].mxu0 %v532
        %v600 = vpop.f32.mrb[0].mxu0
        %v601 = vadd.f32 0.0, %v600
        %v602 = vpop.f32.mrb[0].mxu0
        %603 = vdwg.mxu0
        %v604 = vld [vmem:[#allocation10] sm:$0xff]
        %v605 = vld [vmem:[#allocation10 + $0x8] sm:$0xff]
        %v606 = vld [vmem:[#allocation10 + $0x10] sm:$0xff]
        %v607 = vld [vmem:[#allocation10 + $0x18] sm:$0xff]
        %v608 = vld [vmem:[#allocation10 + $0x20] sm:$0xff]
        %v609 = vld [vmem:[#allocation10 + $0x28] sm:$0xff]
        %v610 = vld [vmem:[#allocation10 + $0x30] sm:$0xff]
        %v611 = vld [vmem:[#allocation10 + $0x38] sm:$0xff]
        %612 = vmatprep.subr.mxu0 0.0
        %613 = vmatpush1.msra.mxu0 %v604
        %614 = vmatprep.subr.mxu0 0.0
        %615 = vmatpush1.msra.mxu0 %v605
        %616 = vmatprep.subr.mxu0 0.0
        %617 = vmatpush1.msra.mxu0 %v606
        %618 = vmatprep.subr.mxu0 0.0
        %619 = vmatpush1.msra.mxu0 %v607
        %620 = vmatprep.subr.mxu0 0.0
        %621 = vmatpush1.msra.mxu0 %v608
        %622 = vmatprep.subr.mxu0 0.0
        %623 = vmatpush1.msra.mxu0 %v609
        %624 = vmatprep.subr.mxu0 0.0
        %625 = vmatpush1.msra.mxu0 %v610
        %626 = vmatprep.subr.mxu0 0.0
        %627 = vmatpush1.msra.mxu0 %v611
        %628 = vmatprep.subr.mxu0 0.0
        %629 = vmatpush1.msra.mxu0 0.0
        %630 = vmatprep.subr.mxu0 0.0
        %631 = vmatpush1.msra.mxu0 0.0
        %632 = vmatprep.subr.mxu0 0.0
        %633 = vmatpush1.msra.mxu0 0.0
        %634 = vmatprep.subr.mxu0 0.0
        %635 = vmatpush1.msra.mxu0 0.0
        %636 = vmatprep.subr.mxu0 0.0
        %637 = vmatpush1.msra.mxu0 0.0
        %638 = vmatprep.subr.mxu0 0.0
        %639 = vmatpush1.msra.mxu0 0.0
        %640 = vmatprep.subr.mxu0 0.0
        %641 = vmatpush1.msra.mxu0 0.0
        %642 = vmatprep.subr.mxu0 0.0
        %643 = vmatpush1.msra.mxu0 0.0
        %644 = vmatprep.subr.mxu0 0.0
        %645 = vmatpush1.msra.mxu0 0.0
        %646 = vmatprep.subr.mxu0 0.0
        %647 = vmatpush1.msra.mxu0 0.0
        %648 = vmatprep.subr.mxu0 0.0
        %649 = vmatpush1.msra.mxu0 0.0
        %650 = vmatprep.subr.mxu0 0.0
        %651 = vmatpush1.msra.mxu0 0.0
        %652 = vmatprep.subr.mxu0 0.0
        %653 = vmatpush1.msra.mxu0 0.0
        %654 = vmatprep.subr.mxu0 0.0
        %655 = vmatpush1.msra.mxu0 0.0
        %656 = vmatprep.subr.mxu0 0.0
        %657 = vmatpush1.msra.mxu0 0.0
        %658 = vmatprep.subr.mxu0 0.0
        %659 = vmatpush1.msra.mxu0 0.0
        %660 = vmatprep.subr.mxu0 0.0
        %661 = vmatpush1.msra.mxu0 0.0
        %662 = vmatprep.subr.mxu0 0.0
        %663 = vmatpush1.msra.mxu0 0.0
        %664 = vmatprep.subr.mxu0 0.0
        %665 = vmatpush1.msra.mxu0 0.0
        %666 = vmatprep.subr.mxu0 0.0
        %667 = vmatpush1.msra.mxu0 0.0
        %668 = vmatprep.subr.mxu0 0.0
        %669 = vmatpush1.msra.mxu0 0.0
        %670 = vmatprep.subr.mxu0 0.0
        %671 = vmatpush1.msra.mxu0 0.0
        %672 = vmatprep.subr.mxu0 0.0
        %673 = vmatpush1.msra.mxu0 0.0
        %674 = vmatprep.subr.mxu0 0.0
        %675 = vmatpush1.msra.mxu0 0.0
        %676 = vmatprep.mubr.f32.mxu0 0.0
        %677 = vmatmul.mubr.f32.gmra.mrb[0].mxu0 %v532
        %v678 = vpop.f32.mrb[0].mxu0
        %v679 = vadd.f32 0.0, %v678
        %v680 = vpop.f32.mrb[0].mxu0
        %681 = vdwg.mxu0
        %v682 = vld [vmem:[#allocation11] sm:$0xff]
        %v683 = vld [vmem:[#allocation11 + $0x8] sm:$0xff]
        %v684 = vld [vmem:[#allocation11 + $0x10] sm:$0xff]
        %v685 = vld [vmem:[#allocation11 + $0x18] sm:$0xff]
        %v686 = vld [vmem:[#allocation11 + $0x20] sm:$0xff]
        %v687 = vld [vmem:[#allocation11 + $0x28] sm:$0xff]
        %v688 = vld [vmem:[#allocation11 + $0x30] sm:$0xff]
        %v689 = vld [vmem:[#allocation11 + $0x38] sm:$0xff]
        %690 = vmatprep.subr.mxu0 0.0
        %691 = vmatpush1.msra.mxu0 %v682
        %692 = vmatprep.subr.mxu0 0.0
        %693 = vmatpush1.msra.mxu0 %v683
        %694 = vmatprep.subr.mxu0 0.0
        %695 = vmatpush1.msra.mxu0 %v684
        %696 = vmatprep.subr.mxu0 0.0
        %697 = vmatpush1.msra.mxu0 %v685
        %698 = vmatprep.subr.mxu0 0.0
        %699 = vmatpush1.msra.mxu0 %v686
        %700 = vmatprep.subr.mxu0 0.0
        %701 = vmatpush1.msra.mxu0 %v687
        %702 = vmatprep.subr.mxu0 0.0
        %703 = vmatpush1.msra.mxu0 %v688
        %704 = vmatprep.subr.mxu0 0.0
        %705 = vmatpush1.msra.mxu0 %v689
        %706 = vmatprep.subr.mxu0 0.0
        %707 = vmatpush1.msra.mxu0 0.0
        %708 = vmatprep.subr.mxu0 0.0
        %709 = vmatpush1.msra.mxu0 0.0
        %710 = vmatprep.subr.mxu0 0.0
        %711 = vmatpush1.msra.mxu0 0.0
        %712 = vmatprep.subr.mxu0 0.0
        %713 = vmatpush1.msra.mxu0 0.0
        %714 = vmatprep.subr.mxu0 0.0
        %715 = vmatpush1.msra.mxu0 0.0
        %716 = vmatprep.subr.mxu0 0.0
        %717 = vmatpush1.msra.mxu0 0.0
        %718 = vmatprep.subr.mxu0 0.0
        %719 = vmatpush1.msra.mxu0 0.0
        %720 = vmatprep.subr.mxu0 0.0
        %721 = vmatpush1.msra.mxu0 0.0
        %722 = vmatprep.subr.mxu0 0.0
        %723 = vmatpush1.msra.mxu0 0.0
        %724 = vmatprep.subr.mxu0 0.0
        %725 = vmatpush1.msra.mxu0 0.0
        %726 = vmatprep.subr.mxu0 0.0
        %727 = vmatpush1.msra.mxu0 0.0
        %728 = vmatprep.subr.mxu0 0.0
        %729 = vmatpush1.msra.mxu0 0.0
        %730 = vmatprep.subr.mxu0 0.0
        %731 = vmatpush1.msra.mxu0 0.0
        %732 = vmatprep.subr.mxu0 0.0
        %733 = vmatpush1.msra.mxu0 0.0
        %734 = vmatprep.subr.mxu0 0.0
        %735 = vmatpush1.msra.mxu0 0.0
        %736 = vmatprep.subr.mxu0 0.0
        %737 = vmatpush1.msra.mxu0 0.0
        %738 = vmatprep.subr.mxu0 0.0
        %739 = vmatpush1.msra.mxu0 0.0
        %740 = vmatprep.subr.mxu0 0.0
        %741 = vmatpush1.msra.mxu0 0.0
        %742 = vmatprep.subr.mxu0 0.0
        %743 = vmatpush1.msra.mxu0 0.0
        %744 = vmatprep.subr.mxu0 0.0
        %745 = vmatpush1.msra.mxu0 0.0
        %746 = vmatprep.subr.mxu0 0.0
        %747 = vmatpush1.msra.mxu0 0.0
        %748 = vmatprep.subr.mxu0 0.0
        %749 = vmatpush1.msra.mxu0 0.0
        %750 = vmatprep.subr.mxu0 0.0
        %751 = vmatpush1.msra.mxu0 0.0
        %752 = vmatprep.subr.mxu0 0.0
        %753 = vmatpush1.msra.mxu0 0.0
        %754 = vmatprep.mubr.f32.mxu0 0.0
        %755 = vmatmul.mubr.f32.gmra.mrb[0].mxu0 %v532
        %v756 = vpop.f32.mrb[0].mxu0
        %v757 = vadd.f32 0.0, %v756
        %v758 = vpop.f32.mrb[0].mxu0
        %759 = vdwg.mxu0
        %v760 = vld [vmem:[%s444] sm:$0xff]
        %v761 = vld [vmem:[%s453] sm:$0xff]
        %v762 = vmul.f32 %v601, %v760
        %764 = vrot.lane.b32.xlu0 %v761, 8
        %v765 = vpop.permute.xlu0 %764
        %v767 = vmul.f32 %v601, %v765
        %769 = vrot.lane.b32.xlu0 %v767, 120
        %v770 = vpop.permute.xlu0 %769
        %v772 = vsub.f32 %v762, %v770
        %774 = vrot.lane.b32.xlu0 %v760, 8
        %v775 = vpop.permute.xlu0 %774
        %v777 = vmul.f32 %v601, %v775
        %v778 = vmul.f32 %v601, %v761
        %780 = vrot.lane.b32.xlu0 %v778, 8
        %v781 = vpop.permute.xlu0 %780
        %v783 = vadd.f32 %v777, %v781
        %vm784 = vcmask 64512
        %v785 = vsel %vm784, %v772, %v783
        %v786 = vmul.f32 %v785, 0.25
        %vm787 = vcmask 130048
        %788 = vst.msk [vmem:[%s503] sm:$0xff] %vm787, %v786
        %v789 = vmul.f32 %v679, %v760
        %v790 = vmul.f32 %v679, %v765
        %792 = vrot.lane.b32.xlu0 %v790, 120
        %v793 = vpop.permute.xlu0 %792
        %v795 = vsub.f32 %v789, %v793
        %v796 = vmul.f32 %v679, %v775
        %v797 = vmul.f32 %v679, %v761
        %799 = vrot.lane.b32.xlu0 %v797, 8
        %v800 = vpop.permute.xlu0 %799
        %v802 = vadd.f32 %v796, %v800
        %v803 = vsel %vm784, %v795, %v802
        %804 = vst.msk [vmem:[%s510] sm:$0xff] %vm787, %v803
        %805 = vst.msk [vmem:[%s517] sm:$0xff] %vm787, %v757
        %806 = vrot.lane.b32.xlu0 %v760, 16
        %v807 = vpop.permute.xlu0 %806
        %v809 = vmul.f32 %v601, %v807
        %810 = vrot.lane.b32.xlu0 %v761, 24
        %v811 = vpop.permute.xlu0 %810
        %v813 = vmul.f32 %v601, %v811
        %815 = vrot.lane.b32.xlu0 %v813, 120
        %v816 = vpop.permute.xlu0 %815
        %v818 = vsub.f32 %v809, %v816
        %819 = vrot.lane.b32.xlu0 %v760, 24
        %v820 = vpop.permute.xlu0 %819
        %v822 = vmul.f32 %v601, %v820
        %823 = vrot.lane.b32.xlu0 %v761, 16
        %v824 = vpop.permute.xlu0 %823
        %v826 = vmul.f32 %v601, %v824
        %828 = vrot.lane.b32.xlu0 %v826, 8
        %v829 = vpop.permute.xlu0 %828
        %v831 = vadd.f32 %v822, %v829
        %833 = vrot.lane.b32.xlu0 %v818, 112
        %v834 = vpop.permute.xlu0 %833
        %837 = vrot.lane.b32.xlu0 %v831, 112
        %v838 = vpop.permute.xlu0 %837
        %v840 = vsel %vm784, %v834, %v838
        %v841 = vmul.f32 %v840, 0.25
        %s842 = scalar_lea.vmem %s503, 8 [#allocation13]
        %843 = vst.msk [vmem:[%s842] sm:$0xff] %vm787, %v841
        %v844 = vmul.f32 %v679, %v807
        %v845 = vmul.f32 %v679, %v811
        %847 = vrot.lane.b32.xlu0 %v845, 120
        %v848 = vpop.permute.xlu0 %847
        %v850 = vsub.f32 %v844, %v848
        %v851 = vmul.f32 %v679, %v820
        %v852 = vmul.f32 %v679, %v824
        %854 = vrot.lane.b32.xlu0 %v852, 8
        %v855 = vpop.permute.xlu0 %854
        %v857 = vadd.f32 %v851, %v855
        %859 = vrot.lane.b32.xlu0 %v850, 112
        %v860 = vpop.permute.xlu0 %859
        %863 = vrot.lane.b32.xlu0 %v857, 112
        %v864 = vpop.permute.xlu0 %863
        %v866 = vsel %vm784, %v860, %v864
        %s867 = scalar_lea.vmem %s510, 8 [#allocation14]
        %868 = vst.msk [vmem:[%s867] sm:$0xff] %vm787, %v866
        %870 = vrot.lane.b32.xlu0 %v757, 112
        %v871 = vpop.permute.xlu0 %870
        %s873 = scalar_lea.vmem %s517, 8 [#allocation16]
        %874 = vst.msk [vmem:[%s873] sm:$0xff] %vm787, %v871
        %875 = vrot.lane.b32.xlu0 %v760, 32
        %v876 = vpop.permute.xlu0 %875
        %v878 = vmul.f32 %v601, %v876
        %879 = vrot.lane.b32.xlu0 %v761, 40
        %v880 = vpop.permute.xlu0 %879
        %v882 = vmul.f32 %v601, %v880
        %884 = vrot.lane.b32.xlu0 %v882, 120
        %v885 = vpop.permute.xlu0 %884
        %v887 = vsub.f32 %v878, %v885
        %888 = vrot.lane.b32.xlu0 %v760, 40
        %v889 = vpop.permute.xlu0 %888
        %v891 = vmul.f32 %v601, %v889
        %892 = vrot.lane.b32.xlu0 %v761, 32
        %v893 = vpop.permute.xlu0 %892
        %v895 = vmul.f32 %v601, %v893
        %897 = vrot.lane.b32.xlu0 %v895, 8
        %v898 = vpop.permute.xlu0 %897
        %v900 = vadd.f32 %v891, %v898
        %902 = vrot.lane.b32.xlu0 %v887, 96
        %v903 = vpop.permute.xlu0 %902
        %906 = vrot.lane.b32.xlu0 %v900, 96
        %v907 = vpop.permute.xlu0 %906
        %v909 = vsel %vm784, %v903, %v907
        %v910 = vmul.f32 %v909, 0.25
        %s911 = scalar_lea.vmem %s503, 16 [#allocation13]
        %912 = vst.msk [vmem:[%s911] sm:$0xff] %vm787, %v910
        %v913 = vmul.f32 %v679, %v876
        %v914 = vmul.f32 %v679, %v880
        %916 = vrot.lane.b32.xlu0 %v914, 120
        %v917 = vpop.permute.xlu0 %916
        %v919 = vsub.f32 %v913, %v917
        %v920 = vmul.f32 %v679, %v889
        %v921 = vmul.f32 %v679, %v893
        %923 = vrot.lane.b32.xlu0 %v921, 8
        %v924 = vpop.permute.xlu0 %923
        %v926 = vadd.f32 %v920, %v924
        %928 = vrot.lane.b32.xlu0 %v919, 96
        %v929 = vpop.permute.xlu0 %928
        %932 = vrot.lane.b32.xlu0 %v926, 96
        %v933 = vpop.permute.xlu0 %932
        %v935 = vsel %vm784, %v929, %v933
        %s936 = scalar_lea.vmem %s510, 16 [#allocation14]
        %937 = vst.msk [vmem:[%s936] sm:$0xff] %vm787, %v935
        %938 = vrot.lane.b32.xlu0 %v757, 96
        %v939 = vpop.permute.xlu0 %938
        %s941 = scalar_lea.vmem %s517, 16 [#allocation16]
        %942 = vst.msk [vmem:[%s941] sm:$0xff] %vm787, %v939
        %943 = vrot.lane.b32.xlu0 %v760, 48
        %v944 = vpop.permute.xlu0 %943
        %v946 = vmul.f32 %v601, %v944
        %947 = vrot.lane.b32.xlu0 %v761, 56
        %v948 = vpop.permute.xlu0 %947
        %v950 = vmul.f32 %v601, %v948
        %952 = vrot.lane.b32.xlu0 %v950, 120
        %v953 = vpop.permute.xlu0 %952
        %v955 = vsub.f32 %v946, %v953
        %956 = vrot.lane.b32.xlu0 %v760, 56
        %v957 = vpop.permute.xlu0 %956
        %v959 = vmul.f32 %v601, %v957
        %960 = vrot.lane.b32.xlu0 %v761, 48
        %v961 = vpop.permute.xlu0 %960
        %v963 = vmul.f32 %v601, %v961
        %965 = vrot.lane.b32.xlu0 %v963, 8
        %v966 = vpop.permute.xlu0 %965
        %v968 = vadd.f32 %v959, %v966
        %970 = vrot.lane.b32.xlu0 %v955, 80
        %v971 = vpop.permute.xlu0 %970
        %974 = vrot.lane.b32.xlu0 %v968, 80
        %v975 = vpop.permute.xlu0 %974
        %v977 = vsel %vm784, %v971, %v975
        %v978 = vmul.f32 %v977, 0.25
        %s979 = scalar_lea.vmem %s503, 24 [#allocation13]
        %980 = vst.msk [vmem:[%s979] sm:$0xff] %vm787, %v978
        %v981 = vmul.f32 %v679, %v944
        %v982 = vmul.f32 %v679, %v948
        %984 = vrot.lane.b32.xlu0 %v982, 120
        %v985 = vpop.permute.xlu0 %984
        %v987 = vsub.f32 %v981, %v985
        %v988 = vmul.f32 %v679, %v957
        %v989 = vmul.f32 %v679, %v961
        %991 = vrot.lane.b32.xlu0 %v989, 8
        %v992 = vpop.permute.xlu0 %991
        %v994 = vadd.f32 %v988, %v992
        %996 = vrot.lane.b32.xlu0 %v987, 80
        %v997 = vpop.permute.xlu0 %996
        %1000 = vrot.lane.b32.xlu0 %v994, 80
        %v1001 = vpop.permute.xlu0 %1000
        %v1003 = vsel %vm784, %v997, %v1001
        %s1004 = scalar_lea.vmem %s510, 24 [#allocation14]
        %1005 = vst.msk [vmem:[%s1004] sm:$0xff] %vm787, %v1003
        %1006 = vrot.lane.b32.xlu0 %v757, 80
        %v1007 = vpop.permute.xlu0 %1006
        %s1009 = scalar_lea.vmem %s517, 24 [#allocation16]
        %1010 = vst.msk [vmem:[%s1009] sm:$0xff] %vm787, %v1007
        %s1011 = sand.u32 %s227, 1
        %s1012 = scalar_lea.sflag [#allocation4], %s1011
        %s1013 = sand.u32 %s227, 1
        %s1014 = smul.addr %s1013, 32
        %s1015 = scalar_lea.vmem [#allocation13], %s1014
        %s1016 = sand.u32 %s34, 1
        %s1017 = scalar_lea.sflag [#allocation15], %s1016
        %s1018 = sand.u32 %s257, 1
        %s1019 = smul.addr %s1018, 32
        %s1020 = scalar_lea.vmem [#allocation14], %s1019
        %s1021 = sand.u32 %s34, 1
        %s1022 = scalar_lea.sflag [#allocation15], %s1021
        %s1023 = sand.u32 %s287, 1
        %s1024 = smul.addr %s1023, 32
        %s1025 = scalar_lea.vmem [#allocation16], %s1024
        // Predicated region
        $region69: #{tpu_custom_call.1} parent=43 // pred_check
          %p1026 = pneg %p237
        $region70: #{tpu_custom_call.1} parent=43 // pred_check_branch
          %1028 = sbr.rel (%p1026) target = $region72
        $region71: #{tpu_custom_call.1} parent=43 // pred_region
          %s1029 = smul.u32 4, %s39
          %s1031 = ssub.s32 512, 512
          %1032 = vsyncadd %s1012, %s1031
          %s1033 = sadd.s32 %s41, %s1029
          %s1034 = smul.addr %s40, 4
          %s1035 = sadd.s32 %s1033, %s1034
          %s1036 = smul.addr %s1035, 128
          %s1037 = scalar_lea.hbm %s6, %s1036
          %s1038 = sshll.u32 %s1015, 4
          %s1039 = int_to_ptr.vmem [resolvable:$true] %s1038
          %1044 = dma.vmem_to_hbm [thread:$0]  %s1039, 512, %s1037, %s1012, 128, 128, 8
        $region72: #{tpu_custom_call.1} parent=43 // pred_fallthru
          _
        // Predicated region
        $region73: #{tpu_custom_call.1} parent=43 // pred_check
          %p1045 = pneg %p267
        $region74: #{tpu_custom_call.1} parent=43 // pred_check_branch
          %1047 = sbr.rel (%p1045) target = $region76
        $region75: #{tpu_custom_call.1} parent=43 // pred_region
          %s1048 = smul.u32 4, %s39
          %s1050 = ssub.s32 512, 512
          %1051 = vsyncadd %s1017, %s1050
          %s1052 = sadd.s32 %s41, %s1048
          %s1053 = smul.addr %s40, 4
          %s1054 = sadd.s32 %s1052, %s1053
          %s1055 = smul.addr %s1054, 128
          %s1056 = scalar_lea.hbm %s7, %s1055
          %s1057 = sshll.u32 %s1020, 4
          %s1058 = int_to_ptr.vmem [resolvable:$true] %s1057
          %1063 = dma.vmem_to_hbm [thread:$0]  %s1058, 512, %s1056, %s1017, 128, 128, 8
        $region76: #{tpu_custom_call.1} parent=43 // pred_fallthru
          _
        // Predicated region
        $region77: #{tpu_custom_call.1} parent=43 // pred_check
          %p1064 = pneg %p297
        $region78: #{tpu_custom_call.1} parent=43 // pred_check_branch
          %1066 = sbr.rel (%p1064) target = $region80
        $region79: #{tpu_custom_call.1} parent=43 // pred_region
          %s1067 = smul.u32 4, %s39
          %s1069 = ssub.s32 512, 512
          %1070 = vsyncadd %s1022, %s1069
          %s1071 = sadd.s32 %s41, %s1067
          %s1072 = smul.addr %s40, 4
          %s1073 = sadd.s32 %s1071, %s1072
          %s1074 = smul.addr %s1073, 128
          %s1075 = scalar_lea.hbm %s8, %s1074
          %s1076 = sshll.u32 %s1025, 4
          %s1077 = int_to_ptr.vmem [resolvable:$true] %s1076
          %1082 = dma.vmem_to_hbm [thread:$0]  %s1077, 512, %s1075, %s1022, 128, 128, 8
        $region80: #{tpu_custom_call.1} parent=43 // pred_fallthru
          _
      $region44: #{tpu_custom_call.1} parent=5 // pred_fallthru
        _
      %p1083 = scmp.le.s32.totalorder 2, %s29
      // Predicated region
      $region81: #{tpu_custom_call.1} parent=5 // pred_check
        %p1084 = pneg %p1083
      $region82: #{tpu_custom_call.1} parent=5 // pred_check_branch
        %1086 = sbr.rel (%p1084) target = $region84
      $region83: #{tpu_custom_call.1} parent=5 // pred_region
        %s1087 = ssub.s32 %s29, 2
        // Predicated region
        $region85: #{tpu_custom_call.1} parent=83 // pred_check
          %p1088 = pneg %p243
        $region86: #{tpu_custom_call.1} parent=83 // pred_check_branch
          %1090 = sbr.rel (%p1088) target = $region88
        $region87: #{tpu_custom_call.1} parent=83 // pred_region
          %s1091 = sand.u32 %s228, 1
          %s1092 = scalar_lea.sflag [#allocation4], %s1091
          %s1093 = sand.u32 %s228, 1
          %s1094 = smul.addr %s1093, 32
          %s1095 = scalar_lea.vmem [#allocation13], %s1094
          %1096 = dma.done %s1092, 512
        $region88: #{tpu_custom_call.1} parent=83 // pred_fallthru
          _
        // Predicated region
        $region89: #{tpu_custom_call.1} parent=83 // pred_check
          %p1097 = pneg %p273
        $region90: #{tpu_custom_call.1} parent=83 // pred_check_branch
          %1099 = sbr.rel (%p1097) target = $region92
        $region91: #{tpu_custom_call.1} parent=83 // pred_region
          %s1100 = sand.u32 %s35, 1
          %s1101 = scalar_lea.sflag [#allocation15], %s1100
          %s1102 = sand.u32 %s258, 1
          %s1103 = smul.addr %s1102, 32
          %s1104 = scalar_lea.vmem [#allocation14], %s1103
          %1105 = dma.done %s1101, 512
        $region92: #{tpu_custom_call.1} parent=83 // pred_fallthru
          _
        // Predicated region
        $region93: #{tpu_custom_call.1} parent=83 // pred_check
          %p1106 = pneg %p303
        $region94: #{tpu_custom_call.1} parent=83 // pred_check_branch
          %1108 = sbr.rel (%p1106) target = $region96
        $region95: #{tpu_custom_call.1} parent=83 // pred_region
          %s1109 = sand.u32 %s35, 1
          %s1110 = scalar_lea.sflag [#allocation15], %s1109
          %s1111 = sand.u32 %s288, 1
          %s1112 = smul.addr %s1111, 32
          %s1113 = scalar_lea.vmem [#allocation16], %s1112
          %1114 = dma.done %s1110, 512
        $region96: #{tpu_custom_call.1} parent=83 // pred_fallthru
          _
      $region84: #{tpu_custom_call.1} parent=5 // pred_fallthru
        _
    $region6: #{tpu_custom_call.1} parent=1 // loop_footer
      %s33 = sadd.s32 1, %s29
    $region7: #{tpu_custom_call.1} parent=1 // loop_footer_branch
      %28 = sbr.rel target = $region3
    $region8: #{tpu_custom_call.1} parent=1 // loop_exit
      _
    %1115 = vsyncpa [#allocation3], 1
    %s1116 = scalar_lea.sflag [#allocation3], 1
    %1117 = vsyncpa %s1116, 1
    %1118 = vsyncpa [#allocation6], 1
    %s1119 = scalar_lea.sflag [#allocation6], 1
    %1120 = vsyncpa %s1119, 1
    %1121 = vsyncpa [#allocation9], 1
    %1122 = vsyncpa [#allocation12], 1
    %1123 = vsyncpa [#allocation4], 1
    %s1124 = scalar_lea.sflag [#allocation4], 1
    %1125 = vsyncpa %s1124, 1
    %1126 = vsyncpa [#allocation15], 1
    %s1127 = scalar_lea.sflag [#allocation15], 1
    %1128 = vsyncpa %s1127, 1

</llo_original>
